<compile_context>
chip_gen: v6e
topology: v6e:2x2x1
jax: 0.10.0
libtpu: 0.0.40
codegen_flags: <defaults>
</compile_context>

<pallas_src>
import jax
import jax.numpy as jnp
from jax.experimental import pallas as pl
from jax.experimental.pallas import tpu as pltpu

LN_EPS = 1e-5
LANE = 128  # lane-dense output width


def critic_kernel(obs_ref, act_ref,
                  w1_ref, b1_ref, g_ref, beta_ref,
                  wq1_ref, bq1_ref,
                  w2a_ref, b2a_ref, w2b_ref, b2b_ref,
                  w3_ref, hb_ref,
                  out_ref):
    # ---- trunk: Linear (bf16 x bf16 -> f32 acc) -> LayerNorm -> tanh (f32) ----
    h = jnp.dot(obs_ref[...], w1_ref[...],
                preferred_element_type=jnp.float32) + b1_ref[...]
    mean = jnp.mean(h, axis=-1, keepdims=True)
    cen = h - mean
    var = jnp.mean(cen * cen, axis=-1, keepdims=True)
    h = cen * jax.lax.rsqrt(var + LN_EPS) * g_ref[...] + beta_ref[...]
    h = jnp.tanh(h)

    # ---- fused first Q layer: x = [h | action_pad] (128-lane aligned parts),
    #      one full-depth dot -> [tb, 2H] covering both heads ----
    x = jnp.concatenate([h.astype(jnp.bfloat16), act_ref[...]], axis=-1)
    x1 = jnp.dot(x, wq1_ref[...], preferred_element_type=jnp.float32) + bq1_ref[...]
    x1 = jnp.maximum(x1, 0.0).astype(jnp.bfloat16)

    # ---- per-head hidden layers (hidden x hidden, bf16 operands) ----
    hdim = w2a_ref.shape[0]
    y1 = jnp.dot(x1[:, :hdim], w2a_ref[...],
                 preferred_element_type=jnp.float32) + b2a_ref[...]
    y2 = jnp.dot(x1[:, hdim:], w2b_ref[...],
                 preferred_element_type=jnp.float32) + b2b_ref[...]
    y = jnp.concatenate([jnp.maximum(y1, 0.0).astype(jnp.bfloat16),
                         jnp.maximum(y2, 0.0).astype(jnp.bfloat16)], axis=-1)

    # ---- fused lane-dense head: [tb, 2H] @ [2H, 128]; col 0 = q1, col 1 = q2 ----
    out_ref[...] = jnp.dot(y, w3_ref[...],
                           preferred_element_type=jnp.float32) + hb_ref[...]


def _round_up(x, m):
    return (x + m - 1) // m * m


def _nbytes(a):
    return a.size * a.dtype.itemsize


def prepare_params(p):
    """One-time weight preparation (hoisted out of the per-call path):
    bf16 casts, fusion of the two Q heads' first/last layers, lane padding."""
    repr_dim, feature_dim = p["w1"].shape
    hidden_dim = p["q1_w2"].shape[0]
    act_dim = p["q1_w1"].shape[0] - feature_dim
    act_pad = _round_up(max(act_dim, 1), LANE)  # action folded in as one lane tile

    # fused first Q layer: rows [0, feature) = h part, [feature, feature+act) = action part
    wq1 = jnp.zeros((feature_dim + act_pad, 2 * hidden_dim), jnp.float32)
    wq1 = wq1.at[:feature_dim, :hidden_dim].set(p["q1_w1"][:feature_dim])
    wq1 = wq1.at[:feature_dim, hidden_dim:].set(p["q2_w1"][:feature_dim])
    wq1 = wq1.at[feature_dim:feature_dim + act_dim, :hidden_dim].set(p["q1_w1"][feature_dim:])
    wq1 = wq1.at[feature_dim:feature_dim + act_dim, hidden_dim:].set(p["q2_w1"][feature_dim:])
    bq1 = jnp.concatenate([p["q1_b1"], p["q2_b1"]], axis=1)  # [1, 2H]

    # fused lane-dense final head: q1 rows -> col 0, q2 rows -> col 1
    w3 = jnp.zeros((2 * hidden_dim, LANE), jnp.float32)
    w3 = w3.at[:hidden_dim, 0].set(p["q1_w3"][:, 0])
    w3 = w3.at[hidden_dim:, 1].set(p["q2_w3"][:, 0])
    head_b = (jnp.zeros((1, LANE), jnp.float32)
              .at[0, 0].set(p["q1_b3"][0, 0])
              .at[0, 1].set(p["q2_b3"][0, 0]))

    bf = jnp.bfloat16
    weights = (
        p["w1"].astype(bf), p["b1"], p["ln_g"], p["ln_b"],
        wq1.astype(bf), bq1,
        p["q1_w2"].astype(bf), p["q1_b2"], p["q2_w2"].astype(bf), p["q2_b2"],
        w3.astype(bf), head_b,
    )
    dims = {"repr_dim": int(repr_dim), "feature_dim": int(feature_dim),
            "hidden_dim": int(hidden_dim), "act_dim": int(act_dim),
            "act_pad": int(act_pad)}
    return {"weights": weights, "dims": dims}


def _choose_tb(batch, requested):
    """Batch tile: multiple of 16 (bf16 sublane packing), default 256 fills
    v6e/v7x MXU rows; prefer >= 2 tiles so megacore can split the grid."""
    b16 = _round_up(batch, 16)
    tb = min(_round_up(max(requested, 16), 16), b16)
    if b16 // tb < 2 and b16 >= 32:
        tb = max(16, _round_up(b16 // 2, 16))
    return tb


def critic_forward(obs, action, prepped, *, tb=256):
    """obs: [B, repr_dim] f32, action: [B, act_dim] f32 -> (q1, q2), each [B, 1] f32."""
    dims = prepped["dims"]
    weights = prepped["weights"]
    B, repr_dim = obs.shape
    assert repr_dim == dims["repr_dim"]
    feature_dim, hidden_dim = dims["feature_dim"], dims["hidden_dim"]
    act_dim, act_pad = dims["act_dim"], dims["act_pad"]

    tb = _choose_tb(B, tb)
    Bp = _round_up(B, tb)

    # per-call input prep only (all weight prep lives in prepare_params)
    obs_bf = obs.astype(jnp.bfloat16)
    if Bp != B:
        obs_bf = jnp.pad(obs_bf, ((0, Bp - B), (0, 0)))
    act_bf = jnp.pad(action.astype(jnp.bfloat16),
                     ((0, Bp - B), (0, act_pad - act_dim)))

    # VMEM budget: single-buffered weights + double-buffered I/O tiles + intermediates,
    # capped at ~80% of physical VMEM (≈51 MiB on v7x, ≈102 MiB on v5e/v6e).
    weight_bytes = sum(_nbytes(w) for w in weights)
    io_bytes = 2 * (tb * repr_dim * 2 + tb * act_pad * 2 + tb * LANE * 4)
    interm_bytes = tb * (feature_dim * 8 + (feature_dim + act_pad) * 2
                         + 2 * hidden_dim * 12 + LANE * 4)
    try:
        phys = int(getattr(pltpu.get_tpu_info(), "vmem_capacity_bytes", 128 << 20))
    except Exception:  # conservative fallback (v7x per-TC size)
        phys = 64 << 20
    vmem_limit = int((weight_bytes + io_bytes + interm_bytes) * 1.25) + (8 << 20)
    vmem_limit = min(max(32 << 20, vmem_limit), int(phys * 0.8))

    # weights: whole-array, single-buffered, VMEM-resident across all batch tiles
    resident = pl.BlockSpec(memory_space=pltpu.MemorySpace.VMEM)
    in_specs = (
        [pl.BlockSpec((tb, repr_dim), lambda i: (i, 0)),   # obs tile (pipelined)
         pl.BlockSpec((tb, act_pad), lambda i: (i, 0))]    # action tile (pipelined)
        + [resident] * len(weights)
    )
    # NOTE: if profiling on v6e shows the obs DMA exposed for very large repr_dim,
    # add pipeline_mode=pl.Buffered(3) to the obs spec (VMEM headroom permits it there).
    out_spec = pl.BlockSpec((tb, LANE), lambda i: (i, 0))

    q_pad = pl.pallas_call(
        critic_kernel,
        grid=(Bp // tb,),
        out_shape=jax.ShapeDtypeStruct((Bp, LANE), jnp.float32),
        in_specs=in_specs,
        out_specs=out_spec,
        compiler_params=pltpu.CompilerParams(
            dimension_semantics=("parallel",),   # megacore splits batch tiles
            vmem_limit_bytes=vmem_limit,
        ),
    )(obs_bf, act_bf, *weights)

    q1 = q_pad[:B, 0:1]
    q2 = q_pad[:B, 1:2]
    return q1, q2


def init_params(key, repr_dim, feature_dim, hidden_dim, act_dim):
    ks = jax.random.split(key, 7)

    def lin(k, fan_in, fan_out):
        kw, kb = jax.random.split(k)
        s = 1.0 / jnp.sqrt(jnp.float32(fan_in))
        w = jax.random.uniform(kw, (fan_in, fan_out), jnp.float32, -s, s)
        b = jax.random.uniform(kb, (1, fan_out), jnp.float32, -s, s)
        return w, b

    w1, b1 = lin(ks[0], repr_dim, feature_dim)
    q1_w1, q1_b1 = lin(ks[1], feature_dim + act_dim, hidden_dim)
    q1_w2, q1_b2 = lin(ks[2], hidden_dim, hidden_dim)
    q1_w3, q1_b3 = lin(ks[3], hidden_dim, 1)
    q2_w1, q2_b1 = lin(ks[4], feature_dim + act_dim, hidden_dim)
    q2_w2, q2_b2 = lin(ks[5], hidden_dim, hidden_dim)
    q2_w3, q2_b3 = lin(ks[6], hidden_dim, 1)
    return {
        "w1": w1, "b1": b1,
        "ln_g": jnp.ones((1, feature_dim), jnp.float32),
        "ln_b": jnp.zeros((1, feature_dim), jnp.float32),
        "q1_w1": q1_w1, "q1_b1": q1_b1, "q1_w2": q1_w2, "q1_b2": q1_b2,
        "q1_w3": q1_w3, "q1_b3": q1_b3,
        "q2_w1": q2_w1, "q2_b1": q2_b1, "q2_w2": q2_w2, "q2_b2": q2_b2,
        "q2_w3": q2_w3, "q2_b3": q2_b3,
    }


def critic_reference(obs, action, p):
    """Pure-JAX reference mirroring the kernel's bf16-at-the-dot numerics."""
    bf = jnp.bfloat16

    def bdot(x, w):
        return jnp.dot(x.astype(bf), w.astype(bf), preferred_element_type=jnp.float32)

    h = bdot(obs, p["w1"]) + p["b1"]
    mean = jnp.mean(h, axis=-1, keepdims=True)
    var = jnp.mean((h - mean) ** 2, axis=-1, keepdims=True)
    h = (h - mean) * jax.lax.rsqrt(var + LN_EPS) * p["ln_g"] + p["ln_b"]
    h = jnp.tanh(h)
    x = jnp.concatenate([h, action], axis=1)

    def q(w1, b1, w2, b2, w3, b3):
        y = jnp.maximum(bdot(x, w1) + b1, 0.0)
        y = jnp.maximum(bdot(y, w2) + b2, 0.0)
        return bdot(y, w3) + b3

    q1 = q(p["q1_w1"], p["q1_b1"], p["q1_w2"], p["q1_b2"], p["q1_w3"], p["q1_b3"])
    q2 = q(p["q2_w1"], p["q2_b1"], p["q2_w2"], p["q2_b2"], p["q2_w3"], p["q2_b3"])
    return q1, q2


if __name__ == "__main__":
    key = jax.random.PRNGKey(0)
    k_obs, k_act, k_par = jax.random.split(key, 3)

    # small but alignment-friendly shapes: feature/hidden = 128 lanes,
    # B=32 -> two batch tiles (exercises tiling + VMEM-resident weights + megacore path)
    B, repr_dim, feature_dim, hidden_dim, act_dim = 32, 256, 128, 128, 6

    obs = jax.random.normal(k_obs, (B, repr_dim), jnp.float32)
    action = jax.random.uniform(k_act, (B, act_dim), jnp.float32, -1.0, 1.0)
    params = init_params(k_par, repr_dim, feature_dim, hidden_dim, act_dim)
    prepped = prepare_params(params)   # one-time weight prep (bf16 casts, head fusion)

    q1, q2 = critic_forward(obs, action, prepped, tb=256)
    q1 = jax.block_until_ready(q1)
    q2 = jax.block_until_ready(q2)

    q1_ref, q2_ref = critic_reference(obs, action, params)
    assert q1.shape == (B, 1) and q2.shape == (B, 1)
    assert jnp.allclose(q1, q1_ref, atol=2e-3, rtol=2e-3), "q1 mismatch"
    assert jnp.allclose(q2, q2_ref, atol=2e-3, rtol=2e-3), "q2 mismatch"

    print("KERNEL_OK")
</pallas_src>

<mosaic_0001>
module attributes {stable_mosaic.version = 11 : i64} {
  func.func @critic_kernel(%arg0: i32, %arg1: memref<16x256xbf16, #tpu.memory_space<vmem>>, %arg2: memref<16x128xbf16, #tpu.memory_space<vmem>>, %arg3: memref<256x128xbf16, #tpu.memory_space<vmem>>, %arg4: memref<1x128xf32, #tpu.memory_space<vmem>>, %arg5: memref<1x128xf32, #tpu.memory_space<vmem>>, %arg6: memref<1x128xf32, #tpu.memory_space<vmem>>, %arg7: memref<256x256xbf16, #tpu.memory_space<vmem>>, %arg8: memref<1x256xf32, #tpu.memory_space<vmem>>, %arg9: memref<128x128xbf16, #tpu.memory_space<vmem>>, %arg10: memref<1x128xf32, #tpu.memory_space<vmem>>, %arg11: memref<128x128xbf16, #tpu.memory_space<vmem>>, %arg12: memref<1x128xf32, #tpu.memory_space<vmem>>, %arg13: memref<256x128xbf16, #tpu.memory_space<vmem>>, %arg14: memref<1x128xf32, #tpu.memory_space<vmem>>, %arg15: memref<16x128xf32, #tpu.memory_space<vmem>>) attributes {dimension_semantics = [#tpu.dimension_semantics<parallel>], iteration_bounds = array<i64: 2>, scalar_prefetch = 0 : i64, scratch_operands = 0 : i64, tpu.core_type = #tpu.core_type<tc>, window_params = [{transform_indices = @transform_0, window_bounds = array<i64: 16, 256>}, {transform_indices = @transform_1, window_bounds = array<i64: 16, 128>}, {pipeline_mode = #tpu.pipeline_mode<synchronous>, transform_indices = @transform_2, window_bounds = array<i64: 256, 128>}, {pipeline_mode = #tpu.pipeline_mode<synchronous>, transform_indices = @transform_3, window_bounds = array<i64: 1, 128>}, {pipeline_mode = #tpu.pipeline_mode<synchronous>, transform_indices = @transform_4, window_bounds = array<i64: 1, 128>}, {pipeline_mode = #tpu.pipeline_mode<synchronous>, transform_indices = @transform_5, window_bounds = array<i64: 1, 128>}, {pipeline_mode = #tpu.pipeline_mode<synchronous>, transform_indices = @transform_6, window_bounds = array<i64: 256, 256>}, {pipeline_mode = #tpu.pipeline_mode<synchronous>, transform_indices = @transform_7, window_bounds = array<i64: 1, 256>}, {pipeline_mode = #tpu.pipeline_mode<synchronous>, transform_indices = @transform_8, window_bounds = array<i64: 128, 128>}, {pipeline_mode = #tpu.pipeline_mode<synchronous>, transform_indices = @transform_9, window_bounds = array<i64: 1, 128>}, {pipeline_mode = #tpu.pipeline_mode<synchronous>, transform_indices = @transform_10, window_bounds = array<i64: 128, 128>}, {pipeline_mode = #tpu.pipeline_mode<synchronous>, transform_indices = @transform_11, window_bounds = array<i64: 1, 128>}, {pipeline_mode = #tpu.pipeline_mode<synchronous>, transform_indices = @transform_12, window_bounds = array<i64: 256, 128>}, {pipeline_mode = #tpu.pipeline_mode<synchronous>, transform_indices = @transform_13, window_bounds = array<i64: 1, 128>}, {transform_indices = @transform_14, window_bounds = array<i64: 16, 128>}]} {
    %c0 = arith.constant 0 : index
    %c0_0 = arith.constant 0 : index
    %0 = vector.load %arg1[%c0, %c0_0] : memref<16x256xbf16, #tpu.memory_space<vmem>>, vector<16x256xbf16>
    %c0_1 = arith.constant 0 : index
    %c0_2 = arith.constant 0 : index
    %1 = vector.load %arg3[%c0_1, %c0_2] : memref<256x128xbf16, #tpu.memory_space<vmem>>, vector<256x128xbf16>
    %cst = arith.constant dense<0.000000e+00> : vector<16x128xf32>
    %2 = tpu.matmul %0, %1, %cst {dimension_numbers = #tpu.dot_dimension_numbers<[1], [0], [0], [1], [0, 0, 1, 1], [], []>} : vector<16x256xbf16>, vector<256x128xbf16>, vector<16x128xf32> -> vector<16x128xf32>
    %c0_3 = arith.constant 0 : index
    %c0_4 = arith.constant 0 : index
    %3 = vector.load %arg4[%c0_3, %c0_4] : memref<1x128xf32, #tpu.memory_space<vmem>>, vector<1x128xf32>
    %4 = vector.broadcast %3 : vector<1x128xf32> to vector<16x128xf32>
    %5 = arith.addf %2, %4 : vector<16x128xf32>
    %cst_5 = arith.constant dense<0.000000e+00> : vector<16xf32>
    %6 = vector.multi_reduction <add>, %5, %cst_5 [1] : vector<16x128xf32> to vector<16xf32>
    %7 = vector.shape_cast %6 : vector<16xf32> to vector<16x1xf32>
    %cst_6 = arith.constant 1.280000e+02 : f32
    %8 = vector.broadcast %cst_6 : f32 to vector<16x1xf32>
    %9 = arith.divf %7, %8 : vector<16x1xf32>
    %10 = vector.broadcast %9 : vector<16x1xf32> to vector<16x128xf32>
    %11 = arith.subf %5, %10 : vector<16x128xf32>
    %12 = arith.mulf %11, %11 : vector<16x128xf32>
    %cst_7 = arith.constant dense<0.000000e+00> : vector<16xf32>
    %13 = vector.multi_reduction <add>, %12, %cst_7 [1] : vector<16x128xf32> to vector<16xf32>
    %14 = vector.shape_cast %13 : vector<16xf32> to vector<16x1xf32>
    %cst_8 = arith.constant 1.280000e+02 : f32
    %15 = vector.broadcast %cst_8 : f32 to vector<16x1xf32>
    %16 = arith.divf %14, %15 : vector<16x1xf32>
    %cst_9 = arith.constant 9.99999974E-6 : f32
    %17 = vector.broadcast %cst_9 : f32 to vector<16x1xf32>
    %18 = arith.addf %16, %17 : vector<16x1xf32>
    %19 = math.rsqrt %18 : vector<16x1xf32>
    %20 = vector.broadcast %19 : vector<16x1xf32> to vector<16x128xf32>
    %21 = arith.mulf %11, %20 : vector<16x128xf32>
    %c0_10 = arith.constant 0 : index
    %c0_11 = arith.constant 0 : index
    %22 = vector.load %arg5[%c0_10, %c0_11] : memref<1x128xf32, #tpu.memory_space<vmem>>, vector<1x128xf32>
    %23 = vector.broadcast %22 : vector<1x128xf32> to vector<16x128xf32>
    %24 = arith.mulf %21, %23 : vector<16x128xf32>
    %c0_12 = arith.constant 0 : index
    %c0_13 = arith.constant 0 : index
    %25 = vector.load %arg6[%c0_12, %c0_13] : memref<1x128xf32, #tpu.memory_space<vmem>>, vector<1x128xf32>
    %26 = vector.broadcast %25 : vector<1x128xf32> to vector<16x128xf32>
    %27 = arith.addf %24, %26 : vector<16x128xf32>
    %28 = math.tanh %27 : vector<16x128xf32>
    %29 = arith.truncf %28 : vector<16x128xf32> to vector<16x128xbf16>
    %c0_14 = arith.constant 0 : index
    %c0_15 = arith.constant 0 : index
    %30 = vector.load %arg2[%c0_14, %c0_15] : memref<16x128xbf16, #tpu.memory_space<vmem>>, vector<16x128xbf16>
    %31 = tpu.concatenate %29, %30 in 1 : vector<16x128xbf16>, vector<16x128xbf16> -> vector<16x256xbf16>
    %c0_16 = arith.constant 0 : index
    %c0_17 = arith.constant 0 : index
    %32 = vector.load %arg7[%c0_16, %c0_17] : memref<256x256xbf16, #tpu.memory_space<vmem>>, vector<256x256xbf16>
    %cst_18 = arith.constant dense<0.000000e+00> : vector<16x256xf32>
    %33 = tpu.matmul %31, %32, %cst_18 {dimension_numbers = #tpu.dot_dimension_numbers<[1], [0], [0], [1], [0, 0, 1, 1], [], []>} : vector<16x256xbf16>, vector<256x256xbf16>, vector<16x256xf32> -> vector<16x256xf32>
    %c0_19 = arith.constant 0 : index
    %c0_20 = arith.constant 0 : index
    %34 = vector.load %arg8[%c0_19, %c0_20] : memref<1x256xf32, #tpu.memory_space<vmem>>, vector<1x256xf32>
    %35 = vector.broadcast %34 : vector<1x256xf32> to vector<16x256xf32>
    %36 = arith.addf %33, %35 : vector<16x256xf32>
    %cst_21 = arith.constant 0.000000e+00 : f32
    %37 = vector.broadcast %cst_21 : f32 to vector<16x256xf32>
    %38 = arith.maximumf %36, %37 : vector<16x256xf32>
    %39 = arith.truncf %38 : vector<16x256xf32> to vector<16x256xbf16>
    %40 = vector.extract_strided_slice %39 {offsets = [0, 0], sizes = [16, 128], strides = [1, 1]} : vector<16x256xbf16> to vector<16x128xbf16>
    %c0_22 = arith.constant 0 : index
    %c0_23 = arith.constant 0 : index
    %41 = vector.load %arg9[%c0_22, %c0_23] : memref<128x128xbf16, #tpu.memory_space<vmem>>, vector<128x128xbf16>
    %cst_24 = arith.constant dense<0.000000e+00> : vector<16x128xf32>
    %42 = tpu.matmul %40, %41, %cst_24 {dimension_numbers = #tpu.dot_dimension_numbers<[1], [0], [0], [1], [0, 0, 1, 1], [], []>} : vector<16x128xbf16>, vector<128x128xbf16>, vector<16x128xf32> -> vector<16x128xf32>
    %c0_25 = arith.constant 0 : index
    %c0_26 = arith.constant 0 : index
    %43 = vector.load %arg10[%c0_25, %c0_26] : memref<1x128xf32, #tpu.memory_space<vmem>>, vector<1x128xf32>
    %44 = vector.broadcast %43 : vector<1x128xf32> to vector<16x128xf32>
    %45 = arith.addf %42, %44 : vector<16x128xf32>
    %46 = vector.extract_strided_slice %39 {offsets = [0, 128], sizes = [16, 128], strides = [1, 1]} : vector<16x256xbf16> to vector<16x128xbf16>
    %c0_27 = arith.constant 0 : index
    %c0_28 = arith.constant 0 : index
    %47 = vector.load %arg11[%c0_27, %c0_28] : memref<128x128xbf16, #tpu.memory_space<vmem>>, vector<128x128xbf16>
    %cst_29 = arith.constant dense<0.000000e+00> : vector<16x128xf32>
    %48 = tpu.matmul %46, %47, %cst_29 {dimension_numbers = #tpu.dot_dimension_numbers<[1], [0], [0], [1], [0, 0, 1, 1], [], []>} : vector<16x128xbf16>, vector<128x128xbf16>, vector<16x128xf32> -> vector<16x128xf32>
    %c0_30 = arith.constant 0 : index
    %c0_31 = arith.constant 0 : index
    %49 = vector.load %arg12[%c0_30, %c0_31] : memref<1x128xf32, #tpu.memory_space<vmem>>, vector<1x128xf32>
    %50 = vector.broadcast %49 : vector<1x128xf32> to vector<16x128xf32>
    %51 = arith.addf %48, %50 : vector<16x128xf32>
    %cst_32 = arith.constant 0.000000e+00 : f32
    %52 = vector.broadcast %cst_32 : f32 to vector<16x128xf32>
    %53 = arith.maximumf %45, %52 : vector<16x128xf32>
    %54 = arith.truncf %53 : vector<16x128xf32> to vector<16x128xbf16>
    %cst_33 = arith.constant 0.000000e+00 : f32
    %55 = vector.broadcast %cst_33 : f32 to vector<16x128xf32>
    %56 = arith.maximumf %51, %55 : vector<16x128xf32>
    %57 = arith.truncf %56 : vector<16x128xf32> to vector<16x128xbf16>
    %58 = tpu.concatenate %54, %57 in 1 : vector<16x128xbf16>, vector<16x128xbf16> -> vector<16x256xbf16>
    %c0_34 = arith.constant 0 : index
    %c0_35 = arith.constant 0 : index
    %59 = vector.load %arg13[%c0_34, %c0_35] : memref<256x128xbf16, #tpu.memory_space<vmem>>, vector<256x128xbf16>
    %cst_36 = arith.constant dense<0.000000e+00> : vector<16x128xf32>
    %60 = tpu.matmul %58, %59, %cst_36 {dimension_numbers = #tpu.dot_dimension_numbers<[1], [0], [0], [1], [0, 0, 1, 1], [], []>} : vector<16x256xbf16>, vector<256x128xbf16>, vector<16x128xf32> -> vector<16x128xf32>
    %c0_37 = arith.constant 0 : index
    %c0_38 = arith.constant 0 : index
    %61 = vector.load %arg14[%c0_37, %c0_38] : memref<1x128xf32, #tpu.memory_space<vmem>>, vector<1x128xf32>
    %62 = vector.broadcast %61 : vector<1x128xf32> to vector<16x128xf32>
    %63 = arith.addf %60, %62 : vector<16x128xf32>
    %c0_39 = arith.constant 0 : index
    %c0_40 = arith.constant 0 : index
    %64 = vector.load %arg15[%c0_39, %c0_40] : memref<16x128xf32, #tpu.memory_space<vmem>>, vector<16x128xf32>
    tpu.vector_store %arg15[%c0_39, %c0_40], %63 {strides = array<i32>} : memref<16x128xf32, #tpu.memory_space<vmem>>, vector<16x128xf32>,
    return
  }
  func.func @transform_0(%arg0: i32) -> (i32, i32) {
    %c0_i32 = arith.constant 0 : i32
    %c0_i32_0 = arith.constant 0 : i32
    return %arg0, %c0_i32 : i32, i32
  }
  func.func @transform_1(%arg0: i32) -> (i32, i32) {
    %c0_i32 = arith.constant 0 : i32
    %c0_i32_0 = arith.constant 0 : i32
    return %arg0, %c0_i32 : i32, i32
  }
  func.func @transform_2(%arg0: i32) -> (i32, i32) {
    %c0_i32 = arith.constant 0 : i32
    %c0_i32_0 = arith.constant 0 : i32
    %c0_i32_1 = arith.constant 0 : i32
    return %c0_i32, %c0_i32_0 : i32, i32
  }
  func.func @transform_3(%arg0: i32) -> (i32, i32) {
    %c0_i32 = arith.constant 0 : i32
    %c0_i32_0 = arith.constant 0 : i32
    %c0_i32_1 = arith.constant 0 : i32
    return %c0_i32, %c0_i32_0 : i32, i32
  }
  func.func @transform_4(%arg0: i32) -> (i32, i32) {
    %c0_i32 = arith.constant 0 : i32
    %c0_i32_0 = arith.constant 0 : i32
    %c0_i32_1 = arith.constant 0 : i32
    return %c0_i32, %c0_i32_0 : i32, i32
  }
  func.func @transform_5(%arg0: i32) -> (i32, i32) {
    %c0_i32 = arith.constant 0 : i32
    %c0_i32_0 = arith.constant 0 : i32
    %c0_i32_1 = arith.constant 0 : i32
    return %c0_i32, %c0_i32_0 : i32, i32
  }
  func.func @transform_6(%arg0: i32) -> (i32, i32) {
    %c0_i32 = arith.constant 0 : i32
    %c0_i32_0 = arith.constant 0 : i32
    %c0_i32_1 = arith.constant 0 : i32
    return %c0_i32, %c0_i32_0 : i32, i32
  }
  func.func @transform_7(%arg0: i32) -> (i32, i32) {
    %c0_i32 = arith.constant 0 : i32
    %c0_i32_0 = arith.constant 0 : i32
    %c0_i32_1 = arith.constant 0 : i32
    return %c0_i32, %c0_i32_0 : i32, i32
  }
  func.func @transform_8(%arg0: i32) -> (i32, i32) {
    %c0_i32 = arith.constant 0 : i32
    %c0_i32_0 = arith.constant 0 : i32
    %c0_i32_1 = arith.constant 0 : i32
    return %c0_i32, %c0_i32_0 : i32, i32
  }
  func.func @transform_9(%arg0: i32) -> (i32, i32) {
    %c0_i32 = arith.constant 0 : i32
    %c0_i32_0 = arith.constant 0 : i32
    %c0_i32_1 = arith.constant 0 : i32
    return %c0_i32, %c0_i32_0 : i32, i32
  }
  func.func @transform_10(%arg0: i32) -> (i32, i32) {
    %c0_i32 = arith.constant 0 : i32
    %c0_i32_0 = arith.constant 0 : i32
    %c0_i32_1 = arith.constant 0 : i32
    return %c0_i32, %c0_i32_0 : i32, i32
  }
  func.func @transform_11(%arg0: i32) -> (i32, i32) {
    %c0_i32 = arith.constant 0 : i32
    %c0_i32_0 = arith.constant 0 : i32
    %c0_i32_1 = arith.constant 0 : i32
    return %c0_i32, %c0_i32_0 : i32, i32
  }
  func.func @transform_12(%arg0: i32) -> (i32, i32) {
    %c0_i32 = arith.constant 0 : i32
    %c0_i32_0 = arith.constant 0 : i32
    %c0_i32_1 = arith.constant 0 : i32
    return %c0_i32, %c0_i32_0 : i32, i32
  }
  func.func @transform_13(%arg0: i32) -> (i32, i32) {
    %c0_i32 = arith.constant 0 : i32
    %c0_i32_0 = arith.constant 0 : i32
    %c0_i32_1 = arith.constant 0 : i32
    return %c0_i32, %c0_i32_0 : i32, i32
  }
  func.func @transform_14(%arg0: i32) -> (i32, i32) {
    %c0_i32 = arith.constant 0 : i32
    %c0_i32_0 = arith.constant 0 : i32
    return %arg0, %c0_i32 : i32, i32
  }
}

</mosaic_0001>

<llo_original>
// kernel: tpu_custom_call.1
$region0: #{tpu_custom_call.1}
  #allocation0 [shape = 'u32[]', space=smem, size = 0x4, offset = 0x4, fixed_abs, tag = 'smem constant byte address 0x4 - core index']
  #allocation1 [shape = 'u32[144,128]{1,0:T(1,128)}', space=vmem, size = 0x12000, scoped, tag = 'internal scratch']
  %s0 = inlined_call_operand.hbm [shape: bf16[32,256], index: 0, kind: input, shape index: {}]
  %s1 = inlined_call_operand.hbm [shape: bf16[32,128], index: 1, kind: input, shape index: {}]
  %s2 = inlined_call_operand.hbm [shape: bf16[256,128], index: 2, kind: input, shape index: {}]
  %s3 = inlined_call_operand.vmem [shape: f32[1,128], index: 3, kind: input, shape index: {}]
  %s4 = inlined_call_operand.vmem [shape: f32[1,128], index: 4, kind: input, shape index: {}]
  %s5 = inlined_call_operand.vmem [shape: f32[1,128], index: 5, kind: input, shape index: {}]
  %s6 = inlined_call_operand.hbm [shape: bf16[256,256], index: 6, kind: input, shape index: {}]
  %s7 = inlined_call_operand.vmem [shape: f32[1,256], index: 7, kind: input, shape index: {}]
  %s8 = inlined_call_operand.hbm [shape: bf16[128,128], index: 8, kind: input, shape index: {}]
  %s9 = inlined_call_operand.vmem [shape: f32[1,128], index: 9, kind: input, shape index: {}]
  %s10 = inlined_call_operand.hbm [shape: bf16[128,128], index: 10, kind: input, shape index: {}]
  %s11 = inlined_call_operand.vmem [shape: f32[1,128], index: 11, kind: input, shape index: {}]
  %s12 = inlined_call_operand.hbm [shape: bf16[256,128], index: 12, kind: input, shape index: {}]
  %s13 = inlined_call_operand.vmem [shape: f32[1,128], index: 13, kind: input, shape index: {}]
  %s14 = inlined_call_operand.hbm [shape: f32[32,128], index: 14, kind: output, shape index: {}]
  %s15 = sld [smem:[#allocation0]]
  $region117: #{tpu_custom_call.1} parent=0
    _
  %s17 = ssub.s32 1, %s15
  %s18 = scalar_select 0, %s17, %s15
  $region1: #{tpu_custom_call.1} parent=0
    #allocation2 [shape = 'u8[16384]{0}', space=vmem, size = 0x4000, scoped, tag = 'input window, operand 0']
    #allocation3 [shape = 's32[2]{0}', space=sflag, size = 0x8, scoped, tag = 'scoped memory for tpu_custom_call.1']
    #allocation4 [shape = 's32[2]{0}', space=sflag, size = 0x8, scoped, tag = 'scoped memory for tpu_custom_call.1']
    #allocation5 [shape = 'u8[8192]{0}', space=vmem, size = 0x2000, scoped, tag = 'input window, operand 1']
    #allocation6 [shape = 's32[2]{0}', space=sflag, size = 0x8, scoped, tag = 'scoped memory for tpu_custom_call.1']
    #allocation7 [shape = 'u8[65536]{0}', space=vmem, size = 0x10000, scoped, tag = 'input window, operand 2, single buffered']
    #allocation8 [shape = 'u8[131072]{0}', space=vmem, size = 0x20000, scoped, tag = 'input window, operand 6, single buffered']
    #allocation9 [shape = 's32[1]{0}', space=sflag, size = 0x4, scoped, tag = 'scoped memory for tpu_custom_call.1']
    #allocation10 [shape = 'u8[32768]{0}', space=vmem, size = 0x8000, scoped, tag = 'input window, operand 8, single buffered']
    #allocation11 [shape = 'u8[32768]{0}', space=vmem, size = 0x8000, scoped, tag = 'input window, operand 10, single buffered']
    #allocation12 [shape = 's32[1]{0}', space=sflag, size = 0x4, scoped, tag = 'scoped memory for tpu_custom_call.1']
    #allocation13 [shape = 'u8[65536]{0}', space=vmem, size = 0x10000, scoped, tag = 'input window, operand 12, single buffered']
    #allocation14 [shape = 'u8[16384]{0}', space=vmem, size = 0x4000, scoped, tag = 'output window, operand 0']
    %19 = vsyncpa [#allocation3], 0
    %s20 = scalar_lea.sflag [#allocation3], 1
    %21 = vsyncpa %s20, 0
    %22 = vsyncpa [#allocation6], 0
    %s23 = scalar_lea.sflag [#allocation6], 1
    %24 = vsyncpa %s23, 0
    %25 = vsyncpa [#allocation9], 0
    %26 = vsyncpa [#allocation12], 0
    %27 = vsyncpa [#allocation4], 0
    %s28 = scalar_lea.sflag [#allocation4], 1
    %29 = vsyncpa %s28, 0
    loop: start=0, step=1, limit=4
    $region2: #{tpu_custom_call.1} parent=1 // loop_pre_header
      _
    $region3: #{tpu_custom_call.1} parent=1 // loop_header
      %s31 = sphi 0, %s35
      %p32 = scmp.ge.s32.totalorder %s31, 4
      %s41 = sphi 0, %s43
      %s44 = sphi 0, %s41
      %s45 = sphi 0, %s44
      %s61 = sphi 0, %s45
      %s67 = sphi 0, %s69
      %s70 = sphi 0, %s67
      %s71 = sphi 0, %s70
      %s87 = sphi 0, %s71
      %s91 = sphi 0, %s91
      %s93 = sphi 0, %s91
      %s94 = sphi 0, %s93
      %s108 = sphi 0, %s94
      %s112 = sphi 0, %s112
      %s114 = sphi 0, %s112
      %s115 = sphi 0, %s114
      %s129 = sphi 0, %s115
      %s133 = sphi 0, %s133
      %s135 = sphi 0, %s133
      %s136 = sphi 0, %s135
      %s150 = sphi 0, %s136
      %s154 = sphi 0, %s154
      %s156 = sphi 0, %s154
      %s157 = sphi 0, %s156
      %s171 = sphi 0, %s157
      %s175 = sphi 0, %s175
      %s177 = sphi 0, %s175
      %s178 = sphi 0, %s177
      %s192 = sphi 0, %s178
      %s196 = sphi 0, %s196
      %s198 = sphi 0, %s196
      %s199 = sphi 0, %s198
      %s213 = sphi 0, %s199
      %s217 = sphi 0, %s217
      %s219 = sphi 0, %s217
      %s220 = sphi 0, %s219
      %s234 = sphi 0, %s220
      %s238 = sphi 0, %s238
      %s240 = sphi 0, %s238
      %s241 = sphi 0, %s240
      %s255 = sphi 0, %s241
      %s259 = sphi 0, %s259
      %s261 = sphi 0, %s259
      %s262 = sphi 0, %s261
      %s276 = sphi 0, %s262
      %s280 = sphi 0, %s280
      %s282 = sphi 0, %s280
      %s283 = sphi 0, %s282
      %s297 = sphi 0, %s283
      %s301 = sphi 0, %s301
      %s303 = sphi 0, %s301
      %s304 = sphi 0, %s303
      %s318 = sphi 0, %s304
      %s322 = sphi 0, %s322
      %s324 = sphi 0, %s322
      %s325 = sphi 0, %s324
      %s339 = sphi 0, %s325
      %s345 = sphi 0, %s347
      %s348 = sphi 0, %s345
      %s349 = sphi 0, %s348
      %s365 = sphi 0, %s349
    $region4: #{tpu_custom_call.1} parent=1 // loop_header_branch
      %34 = sbr.rel (%p32) target = $region8
    $region5: #{tpu_custom_call.1} parent=1 // loop_body
      %s36 = ssub.s32 %s31, 1
      %s37 = ssub.s32 %s31, 2
      %s38 = sadd.s32 %s31, 1
      %s39 = ssub.s32 %s31, %s38
      %p40 = scmp.eq.s32.totalorder %s39, 0
      %s42 = sadd.s32 %s41, 1
      %s43 = scalar_select %p40, %s41, %s42
      %p46 = pneg %p40
      %p47 = scmp.eq.s32.totalorder %s31, 1
      %p48 = por %p46, %p47
      %p49 = scmp.ne.s32.totalorder %s41, %s44
      %p50 = scmp.eq.s32.totalorder %s31, 0
      %p51 = por %p49, %p50
      %p52 = scmp.ne.s32.totalorder %s41, %s44
      %p53 = scmp.eq.s32.totalorder %s36, 1
      %p54 = por %p52, %p53
      %p55 = scmp.ne.s32.totalorder %s44, %s45
      %p56 = scmp.eq.s32.totalorder %s36, 0
      %p57 = por %p55, %p56
      %p58 = scmp.ne.s32.totalorder %s44, %s45
      %p59 = scmp.eq.s32.totalorder %s37, 1
      %p60 = por %p58, %p59
      %p62 = scmp.ne.s32.totalorder %s45, %s61
      %p63 = scmp.eq.s32.totalorder %s37, 0
      %p64 = por %p62, %p63
      %s65 = ssub.s32 %s31, %s38
      %p66 = scmp.eq.s32.totalorder %s65, 0
      %s68 = sadd.s32 %s67, 1
      %s69 = scalar_select %p66, %s67, %s68
      %p72 = pneg %p66
      %p73 = scmp.eq.s32.totalorder %s31, 1
      %p74 = por %p72, %p73
      %p75 = scmp.ne.s32.totalorder %s67, %s70
      %p76 = scmp.eq.s32.totalorder %s31, 0
      %p77 = por %p75, %p76
      %p78 = scmp.ne.s32.totalorder %s67, %s70
      %p79 = scmp.eq.s32.totalorder %s36, 1
      %p80 = por %p78, %p79
      %p81 = scmp.ne.s32.totalorder %s70, %s71
      %p82 = scmp.eq.s32.totalorder %s36, 0
      %p83 = por %p81, %p82
      %p84 = scmp.ne.s32.totalorder %s70, %s71
      %p85 = scmp.eq.s32.totalorder %s37, 1
      %p86 = por %p84, %p85
      %p88 = scmp.ne.s32.totalorder %s71, %s87
      %p89 = scmp.eq.s32.totalorder %s37, 0
      %p90 = por %p88, %p89
      %s92 = sadd.s32 %s91, 1
      %p95 = scmp.eq.s32.totalorder %s31, 1
      %p96 = scmp.ne.s32.totalorder %s91, %s93
      %p97 = scmp.eq.s32.totalorder %s31, 0
      %p98 = por %p96, %p97
      %p99 = scmp.ne.s32.totalorder %s91, %s93
      %p100 = scmp.eq.s32.totalorder %s36, 1
      %p101 = por %p99, %p100
      %p102 = scmp.ne.s32.totalorder %s93, %s94
      %p103 = scmp.eq.s32.totalorder %s36, 0
      %p104 = por %p102, %p103
      %p105 = scmp.ne.s32.totalorder %s93, %s94
      %p106 = scmp.eq.s32.totalorder %s37, 1
      %p107 = por %p105, %p106
      %p109 = scmp.ne.s32.totalorder %s94, %s108
      %p110 = scmp.eq.s32.totalorder %s37, 0
      %p111 = por %p109, %p110
      %s113 = sadd.s32 %s112, 1
      %p116 = scmp.eq.s32.totalorder %s31, 1
      %p117 = scmp.ne.s32.totalorder %s112, %s114
      %p118 = scmp.eq.s32.totalorder %s31, 0
      %p119 = por %p117, %p118
      %p120 = scmp.ne.s32.totalorder %s112, %s114
      %p121 = scmp.eq.s32.totalorder %s36, 1
      %p122 = por %p120, %p121
      %p123 = scmp.ne.s32.totalorder %s114, %s115
      %p124 = scmp.eq.s32.totalorder %s36, 0
      %p125 = por %p123, %p124
      %p126 = scmp.ne.s32.totalorder %s114, %s115
      %p127 = scmp.eq.s32.totalorder %s37, 1
      %p128 = por %p126, %p127
      %p130 = scmp.ne.s32.totalorder %s115, %s129
      %p131 = scmp.eq.s32.totalorder %s37, 0
      %p132 = por %p130, %p131
      %s134 = sadd.s32 %s133, 1
      %p137 = scmp.eq.s32.totalorder %s31, 1
      %p138 = scmp.ne.s32.totalorder %s133, %s135
      %p139 = scmp.eq.s32.totalorder %s31, 0
      %p140 = por %p138, %p139
      %p141 = scmp.ne.s32.totalorder %s133, %s135
      %p142 = scmp.eq.s32.totalorder %s36, 1
      %p143 = por %p141, %p142
      %p144 = scmp.ne.s32.totalorder %s135, %s136
      %p145 = scmp.eq.s32.totalorder %s36, 0
      %p146 = por %p144, %p145
      %p147 = scmp.ne.s32.totalorder %s135, %s136
      %p148 = scmp.eq.s32.totalorder %s37, 1
      %p149 = por %p147, %p148
      %p151 = scmp.ne.s32.totalorder %s136, %s150
      %p152 = scmp.eq.s32.totalorder %s37, 0
      %p153 = por %p151, %p152
      %s155 = sadd.s32 %s154, 1
      %p158 = scmp.eq.s32.totalorder %s31, 1
      %p159 = scmp.ne.s32.totalorder %s154, %s156
      %p160 = scmp.eq.s32.totalorder %s31, 0
      %p161 = por %p159, %p160
      %p162 = scmp.ne.s32.totalorder %s154, %s156
      %p163 = scmp.eq.s32.totalorder %s36, 1
      %p164 = por %p162, %p163
      %p165 = scmp.ne.s32.totalorder %s156, %s157
      %p166 = scmp.eq.s32.totalorder %s36, 0
      %p167 = por %p165, %p166
      %p168 = scmp.ne.s32.totalorder %s156, %s157
      %p169 = scmp.eq.s32.totalorder %s37, 1
      %p170 = por %p168, %p169
      %p172 = scmp.ne.s32.totalorder %s157, %s171
      %p173 = scmp.eq.s32.totalorder %s37, 0
      %p174 = por %p172, %p173
      %s176 = sadd.s32 %s175, 1
      %p179 = scmp.eq.s32.totalorder %s31, 1
      %p180 = scmp.ne.s32.totalorder %s175, %s177
      %p181 = scmp.eq.s32.totalorder %s31, 0
      %p182 = por %p180, %p181
      %p183 = scmp.ne.s32.totalorder %s175, %s177
      %p184 = scmp.eq.s32.totalorder %s36, 1
      %p185 = por %p183, %p184
      %p186 = scmp.ne.s32.totalorder %s177, %s178
      %p187 = scmp.eq.s32.totalorder %s36, 0
      %p188 = por %p186, %p187
      %p189 = scmp.ne.s32.totalorder %s177, %s178
      %p190 = scmp.eq.s32.totalorder %s37, 1
      %p191 = por %p189, %p190
      %p193 = scmp.ne.s32.totalorder %s178, %s192
      %p194 = scmp.eq.s32.totalorder %s37, 0
      %p195 = por %p193, %p194
      %s197 = sadd.s32 %s196, 1
      %p200 = scmp.eq.s32.totalorder %s31, 1
      %p201 = scmp.ne.s32.totalorder %s196, %s198
      %p202 = scmp.eq.s32.totalorder %s31, 0
      %p203 = por %p201, %p202
      %p204 = scmp.ne.s32.totalorder %s196, %s198
      %p205 = scmp.eq.s32.totalorder %s36, 1
      %p206 = por %p204, %p205
      %p207 = scmp.ne.s32.totalorder %s198, %s199
      %p208 = scmp.eq.s32.totalorder %s36, 0
      %p209 = por %p207, %p208
      %p210 = scmp.ne.s32.totalorder %s198, %s199
      %p211 = scmp.eq.s32.totalorder %s37, 1
      %p212 = por %p210, %p211
      %p214 = scmp.ne.s32.totalorder %s199, %s213
      %p215 = scmp.eq.s32.totalorder %s37, 0
      %p216 = por %p214, %p215
      %s218 = sadd.s32 %s217, 1
      %p221 = scmp.eq.s32.totalorder %s31, 1
      %p222 = scmp.ne.s32.totalorder %s217, %s219
      %p223 = scmp.eq.s32.totalorder %s31, 0
      %p224 = por %p222, %p223
      %p225 = scmp.ne.s32.totalorder %s217, %s219
      %p226 = scmp.eq.s32.totalorder %s36, 1
      %p227 = por %p225, %p226
      %p228 = scmp.ne.s32.totalorder %s219, %s220
      %p229 = scmp.eq.s32.totalorder %s36, 0
      %p230 = por %p228, %p229
      %p231 = scmp.ne.s32.totalorder %s219, %s220
      %p232 = scmp.eq.s32.totalorder %s37, 1
      %p233 = por %p231, %p232
      %p235 = scmp.ne.s32.totalorder %s220, %s234
      %p236 = scmp.eq.s32.totalorder %s37, 0
      %p237 = por %p235, %p236
      %s239 = sadd.s32 %s238, 1
      %p242 = scmp.eq.s32.totalorder %s31, 1
      %p243 = scmp.ne.s32.totalorder %s238, %s240
      %p244 = scmp.eq.s32.totalorder %s31, 0
      %p245 = por %p243, %p244
      %p246 = scmp.ne.s32.totalorder %s238, %s240
      %p247 = scmp.eq.s32.totalorder %s36, 1
      %p248 = por %p246, %p247
      %p249 = scmp.ne.s32.totalorder %s240, %s241
      %p250 = scmp.eq.s32.totalorder %s36, 0
      %p251 = por %p249, %p250
      %p252 = scmp.ne.s32.totalorder %s240, %s241
      %p253 = scmp.eq.s32.totalorder %s37, 1
      %p254 = por %p252, %p253
      %p256 = scmp.ne.s32.totalorder %s241, %s255
      %p257 = scmp.eq.s32.totalorder %s37, 0
      %p258 = por %p256, %p257
      %s260 = sadd.s32 %s259, 1
      %p263 = scmp.eq.s32.totalorder %s31, 1
      %p264 = scmp.ne.s32.totalorder %s259, %s261
      %p265 = scmp.eq.s32.totalorder %s31, 0
      %p266 = por %p264, %p265
      %p267 = scmp.ne.s32.totalorder %s259, %s261
      %p268 = scmp.eq.s32.totalorder %s36, 1
      %p269 = por %p267, %p268
      %p270 = scmp.ne.s32.totalorder %s261, %s262
      %p271 = scmp.eq.s32.totalorder %s36, 0
      %p272 = por %p270, %p271
      %p273 = scmp.ne.s32.totalorder %s261, %s262
      %p274 = scmp.eq.s32.totalorder %s37, 1
      %p275 = por %p273, %p274
      %p277 = scmp.ne.s32.totalorder %s262, %s276
      %p278 = scmp.eq.s32.totalorder %s37, 0
      %p279 = por %p277, %p278
      %s281 = sadd.s32 %s280, 1
      %p284 = scmp.eq.s32.totalorder %s31, 1
      %p285 = scmp.ne.s32.totalorder %s280, %s282
      %p286 = scmp.eq.s32.totalorder %s31, 0
      %p287 = por %p285, %p286
      %p288 = scmp.ne.s32.totalorder %s280, %s282
      %p289 = scmp.eq.s32.totalorder %s36, 1
      %p290 = por %p288, %p289
      %p291 = scmp.ne.s32.totalorder %s282, %s283
      %p292 = scmp.eq.s32.totalorder %s36, 0
      %p293 = por %p291, %p292
      %p294 = scmp.ne.s32.totalorder %s282, %s283
      %p295 = scmp.eq.s32.totalorder %s37, 1
      %p296 = por %p294, %p295
      %p298 = scmp.ne.s32.totalorder %s283, %s297
      %p299 = scmp.eq.s32.totalorder %s37, 0
      %p300 = por %p298, %p299
      %s302 = sadd.s32 %s301, 1
      %p305 = scmp.eq.s32.totalorder %s31, 1
      %p306 = scmp.ne.s32.totalorder %s301, %s303
      %p307 = scmp.eq.s32.totalorder %s31, 0
      %p308 = por %p306, %p307
      %p309 = scmp.ne.s32.totalorder %s301, %s303
      %p310 = scmp.eq.s32.totalorder %s36, 1
      %p311 = por %p309, %p310
      %p312 = scmp.ne.s32.totalorder %s303, %s304
      %p313 = scmp.eq.s32.totalorder %s36, 0
      %p314 = por %p312, %p313
      %p315 = scmp.ne.s32.totalorder %s303, %s304
      %p316 = scmp.eq.s32.totalorder %s37, 1
      %p317 = por %p315, %p316
      %p319 = scmp.ne.s32.totalorder %s304, %s318
      %p320 = scmp.eq.s32.totalorder %s37, 0
      %p321 = por %p319, %p320
      %s323 = sadd.s32 %s322, 1
      %p326 = scmp.eq.s32.totalorder %s31, 1
      %p327 = scmp.ne.s32.totalorder %s322, %s324
      %p328 = scmp.eq.s32.totalorder %s31, 0
      %p329 = por %p327, %p328
      %p330 = scmp.ne.s32.totalorder %s322, %s324
      %p331 = scmp.eq.s32.totalorder %s36, 1
      %p332 = por %p330, %p331
      %p333 = scmp.ne.s32.totalorder %s324, %s325
      %p334 = scmp.eq.s32.totalorder %s36, 0
      %p335 = por %p333, %p334
      %p336 = scmp.ne.s32.totalorder %s324, %s325
      %p337 = scmp.eq.s32.totalorder %s37, 1
      %p338 = por %p336, %p337
      %p340 = scmp.ne.s32.totalorder %s325, %s339
      %p341 = scmp.eq.s32.totalorder %s37, 0
      %p342 = por %p340, %p341
      %s343 = ssub.s32 %s31, %s38
      %p344 = scmp.eq.s32.totalorder %s343, 0
      %s346 = sadd.s32 %s345, 1
      %s347 = scalar_select %p344, %s345, %s346
      %p350 = pneg %p344
      %p351 = scmp.eq.s32.totalorder %s31, 1
      %p352 = por %p350, %p351
      %p353 = scmp.ne.s32.totalorder %s345, %s348
      %p354 = scmp.eq.s32.totalorder %s31, 0
      %p355 = por %p353, %p354
      %p356 = scmp.ne.s32.totalorder %s345, %s348
      %p357 = scmp.eq.s32.totalorder %s36, 1
      %p358 = por %p356, %p357
      %p359 = scmp.ne.s32.totalorder %s348, %s349
      %p360 = scmp.eq.s32.totalorder %s36, 0
      %p361 = por %p359, %p360
      %p362 = scmp.ne.s32.totalorder %s348, %s349
      %p363 = scmp.eq.s32.totalorder %s37, 1
      %p364 = por %p362, %p363
      %p366 = scmp.ne.s32.totalorder %s349, %s365
      %p367 = scmp.eq.s32.totalorder %s37, 0
      %p368 = por %p366, %p367
      %p369 = scmp.le.s32.totalorder 1, %s31
      %p370 = scmp.lt.s32.totalorder %s31, 3
      %p371 = pnand %p369, %p370
      %p372 = pneg %p371
      // Predicated region
      $region9: #{tpu_custom_call.1} parent=5 // pred_check
        _
      $region10: #{tpu_custom_call.1} parent=5 // pred_check_branch
        %374 = sbr.rel (%p371) target = $region12
      $region11: #{tpu_custom_call.1} parent=5 // pred_region
        %s375 = ssub.s32 %s31, 1
        // Predicated region
        $region13: #{tpu_custom_call.1} parent=11 // pred_check
          %p376 = pneg %p104
        $region14: #{tpu_custom_call.1} parent=11 // pred_check_branch
          %378 = sbr.rel (%p376) target = $region16
        $region15: #{tpu_custom_call.1} parent=11 // pred_region
          %s380 = ssub.s32 2048, 2048
          %381 = vsyncadd [#allocation6], %s380
          %s382 = sshll.u32 [#allocation7], 4
          %s383 = int_to_ptr.vmem [resolvable:$true] %s382
          %388 = dma.hbm_to_vmem [thread:$0]  %s2, 2048, %s383, [#allocation6], 64, 64, 4
        $region16: #{tpu_custom_call.1} parent=11 // pred_fallthru
          _
        // Predicated region
        $region17: #{tpu_custom_call.1} parent=11 // pred_check
          %p389 = pneg %p125
        $region18: #{tpu_custom_call.1} parent=11 // pred_check_branch
          %391 = sbr.rel (%p389) target = $region20
        $region19: #{tpu_custom_call.1} parent=11 // pred_region
          _
        $region20: #{tpu_custom_call.1} parent=11 // pred_fallthru
          _
        // Predicated region
        $region21: #{tpu_custom_call.1} parent=11 // pred_check
          %p392 = pneg %p146
        $region22: #{tpu_custom_call.1} parent=11 // pred_check_branch
          %394 = sbr.rel (%p392) target = $region24
        $region23: #{tpu_custom_call.1} parent=11 // pred_region
          _
        $region24: #{tpu_custom_call.1} parent=11 // pred_fallthru
          _
        // Predicated region
        $region25: #{tpu_custom_call.1} parent=11 // pred_check
          %p395 = pneg %p167
        $region26: #{tpu_custom_call.1} parent=11 // pred_check_branch
          %397 = sbr.rel (%p395) target = $region28
        $region27: #{tpu_custom_call.1} parent=11 // pred_region
          _
        $region28: #{tpu_custom_call.1} parent=11 // pred_fallthru
          _
        // Predicated region
        $region29: #{tpu_custom_call.1} parent=11 // pred_check
          %p398 = pneg %p188
        $region30: #{tpu_custom_call.1} parent=11 // pred_check_branch
          %400 = sbr.rel (%p398) target = $region32
        $region31: #{tpu_custom_call.1} parent=11 // pred_region
          %s402 = ssub.s32 4096, 4096
          %403 = vsyncadd [#allocation9], %s402
          %s404 = sshll.u32 [#allocation8], 4
          %s405 = int_to_ptr.vmem [resolvable:$true] %s404
          %410 = dma.hbm_to_vmem [thread:$0]  %s6, 4096, %s405, [#allocation9], 128, 128, 8
        $region32: #{tpu_custom_call.1} parent=11 // pred_fallthru
          _
        // Predicated region
        $region33: #{tpu_custom_call.1} parent=11 // pred_check
          %p411 = pneg %p209
        $region34: #{tpu_custom_call.1} parent=11 // pred_check_branch
          %413 = sbr.rel (%p411) target = $region36
        $region35: #{tpu_custom_call.1} parent=11 // pred_region
          _
        $region36: #{tpu_custom_call.1} parent=11 // pred_fallthru
          _
        // Predicated region
        $region37: #{tpu_custom_call.1} parent=11 // pred_check
          %p414 = pneg %p230
        $region38: #{tpu_custom_call.1} parent=11 // pred_check_branch
          %416 = sbr.rel (%p414) target = $region40
        $region39: #{tpu_custom_call.1} parent=11 // pred_region
          %s418 = ssub.s32 1024, 1024
          %419 = vsyncadd [#allocation9], %s418
          %s420 = sshll.u32 [#allocation10], 4
          %s421 = int_to_ptr.vmem [resolvable:$true] %s420
          %426 = dma.hbm_to_vmem [thread:$0]  %s8, 1024, %s421, [#allocation9], 64, 64, 4
        $region40: #{tpu_custom_call.1} parent=11 // pred_fallthru
          _
        // Predicated region
        $region41: #{tpu_custom_call.1} parent=11 // pred_check
          %p427 = pneg %p251
        $region42: #{tpu_custom_call.1} parent=11 // pred_check_branch
          %429 = sbr.rel (%p427) target = $region44
        $region43: #{tpu_custom_call.1} parent=11 // pred_region
          _
        $region44: #{tpu_custom_call.1} parent=11 // pred_fallthru
          _
        // Predicated region
        $region45: #{tpu_custom_call.1} parent=11 // pred_check
          %p430 = pneg %p272
        $region46: #{tpu_custom_call.1} parent=11 // pred_check_branch
          %432 = sbr.rel (%p430) target = $region48
        $region47: #{tpu_custom_call.1} parent=11 // pred_region
          %s434 = ssub.s32 1024, 1024
          %435 = vsyncadd [#allocation12], %s434
          %s436 = sshll.u32 [#allocation11], 4
          %s437 = int_to_ptr.vmem [resolvable:$true] %s436
          %442 = dma.hbm_to_vmem [thread:$0]  %s10, 1024, %s437, [#allocation12], 64, 64, 4
        $region48: #{tpu_custom_call.1} parent=11 // pred_fallthru
          _
        // Predicated region
        $region49: #{tpu_custom_call.1} parent=11 // pred_check
          %p443 = pneg %p293
        $region50: #{tpu_custom_call.1} parent=11 // pred_check_branch
          %445 = sbr.rel (%p443) target = $region52
        $region51: #{tpu_custom_call.1} parent=11 // pred_region
          _
        $region52: #{tpu_custom_call.1} parent=11 // pred_fallthru
          _
        // Predicated region
        $region53: #{tpu_custom_call.1} parent=11 // pred_check
          %p446 = pneg %p314
        $region54: #{tpu_custom_call.1} parent=11 // pred_check_branch
          %448 = sbr.rel (%p446) target = $region56
        $region55: #{tpu_custom_call.1} parent=11 // pred_region
          %s450 = ssub.s32 2048, 2048
          %451 = vsyncadd [#allocation12], %s450
          %s452 = sshll.u32 [#allocation13], 4
          %s453 = int_to_ptr.vmem [resolvable:$true] %s452
          %458 = dma.hbm_to_vmem [thread:$0]  %s12, 2048, %s453, [#allocation12], 64, 64, 4
        $region56: #{tpu_custom_call.1} parent=11 // pred_fallthru
          _
        // Predicated region
        $region57: #{tpu_custom_call.1} parent=11 // pred_check
          %p459 = pneg %p335
        $region58: #{tpu_custom_call.1} parent=11 // pred_check_branch
          %461 = sbr.rel (%p459) target = $region60
        $region59: #{tpu_custom_call.1} parent=11 // pred_region
          _
        $region60: #{tpu_custom_call.1} parent=11 // pred_fallthru
          _
      $region12: #{tpu_custom_call.1} parent=5 // pred_fallthru
        _
      %p462 = scmp.lt.s32.totalorder %s31, 2
      // Predicated region
      $region61: #{tpu_custom_call.1} parent=5 // pred_check
        %p463 = pneg %p462
      $region62: #{tpu_custom_call.1} parent=5 // pred_check_branch
        %465 = sbr.rel (%p463) target = $region64
      $region63: #{tpu_custom_call.1} parent=5 // pred_region
        // Predicated region
        $region65: #{tpu_custom_call.1} parent=63 // pred_check
          %p466 = pneg %p51
        $region66: #{tpu_custom_call.1} parent=63 // pred_check_branch
          %468 = sbr.rel (%p466) target = $region68
        $region67: #{tpu_custom_call.1} parent=63 // pred_region
          %s469 = sand.u32 %s41, 1
          %s470 = scalar_lea.sflag [#allocation3], %s469
          %s471 = sand.u32 %s41, 1
          %s472 = smul.addr %s471, 16
          %s473 = scalar_lea.vmem [#allocation2], %s472
          %s474 = smul.u32 2, %s31
          %s476 = ssub.s32 256, 256
          %477 = vsyncadd %s470, %s476
          %s478 = smul.addr %s474, 2
          %s479 = smul.addr %s478, 64
          %s480 = scalar_lea.hbm %s0, %s479
          %s481 = sshll.u32 %s473, 4
          %s482 = int_to_ptr.vmem [resolvable:$true] %s481
          %487 = dma.hbm_to_vmem [thread:$0]  %s480, 256, %s482, %s470, 128, 128, 8
        $region68: #{tpu_custom_call.1} parent=63 // pred_fallthru
          _
        // Predicated region
        $region69: #{tpu_custom_call.1} parent=63 // pred_check
          %p488 = pneg %p77
        $region70: #{tpu_custom_call.1} parent=63 // pred_check_branch
          %490 = sbr.rel (%p488) target = $region72
        $region71: #{tpu_custom_call.1} parent=63 // pred_region
          %s491 = sand.u32 %s31, 1
          %s492 = scalar_lea.sflag [#allocation6], %s491
          %s493 = sand.u32 %s67, 1
          %s494 = smul.addr %s493, 8
          %s495 = scalar_lea.vmem [#allocation5], %s494
          %s496 = smul.u32 2, %s31
          %s498 = ssub.s32 128, 128
          %499 = vsyncadd %s492, %s498
          %s500 = smul.addr %s496, 64
          %s501 = scalar_lea.hbm %s1, %s500
          %s502 = sshll.u32 %s495, 4
          %s503 = int_to_ptr.vmem [resolvable:$true] %s502
          %508 = dma.hbm_to_vmem [thread:$0]  %s501, 128, %s503, %s492, 64, 64, 4
        $region72: #{tpu_custom_call.1} parent=63 // pred_fallthru
          _
      $region64: #{tpu_custom_call.1} parent=5 // pred_fallthru
        _
      %p509 = scmp.le.s32.totalorder 1, %s31
      %p510 = scmp.lt.s32.totalorder %s31, 3
      %p511 = pnand %p509, %p510
      %p512 = pneg %p511
      // Predicated region
      $region73: #{tpu_custom_call.1} parent=5 // pred_check
        _
      $region74: #{tpu_custom_call.1} parent=5 // pred_check_branch
        %514 = sbr.rel (%p511) target = $region76
      $region75: #{tpu_custom_call.1} parent=5 // pred_region
        %s515 = ssub.s32 %s31, 1
        %s516 = sand.u32 %s44, 1
        %s517 = scalar_lea.sflag [#allocation3], %s516
        %s518 = sand.u32 %s44, 1
        %s519 = smul.addr %s518, 16
        %s520 = scalar_lea.vmem [#allocation2], %s519
        // Predicated region
        $region77: #{tpu_custom_call.1} parent=75 // pred_check
          %p521 = pneg %p57
        $region78: #{tpu_custom_call.1} parent=75 // pred_check_branch
          %523 = sbr.rel (%p521) target = $region80
        $region79: #{tpu_custom_call.1} parent=75 // pred_region
          %524 = dma.done %s517, 256
        $region80: #{tpu_custom_call.1} parent=75 // pred_fallthru
          _
        %s525 = sand.u32 %s36, 1
        %s526 = scalar_lea.sflag [#allocation6], %s525
        %s527 = sand.u32 %s70, 1
        %s528 = smul.addr %s527, 8
        %s529 = scalar_lea.vmem [#allocation5], %s528
        // Predicated region
        $region81: #{tpu_custom_call.1} parent=75 // pred_check
          %p530 = pneg %p83
        $region82: #{tpu_custom_call.1} parent=75 // pred_check_branch
          %532 = sbr.rel (%p530) target = $region84
        $region83: #{tpu_custom_call.1} parent=75 // pred_region
          %533 = dma.done %s526, 128
        $region84: #{tpu_custom_call.1} parent=75 // pred_fallthru
          _
        // Predicated region
        $region85: #{tpu_custom_call.1} parent=75 // pred_check
          %p534 = pneg %p104
        $region86: #{tpu_custom_call.1} parent=75 // pred_check_branch
          %536 = sbr.rel (%p534) target = $region88
        $region87: #{tpu_custom_call.1} parent=75 // pred_region
          %537 = dma.done [#allocation6], 2048
        $region88: #{tpu_custom_call.1} parent=75 // pred_fallthru
          _
        // Predicated region
        $region89: #{tpu_custom_call.1} parent=75 // pred_check
          %p538 = pneg %p188
        $region90: #{tpu_custom_call.1} parent=75 // pred_check_branch
          %540 = sbr.rel (%p538) target = $region92
        $region91: #{tpu_custom_call.1} parent=75 // pred_region
          %541 = dma.done [#allocation9], 4096
        $region92: #{tpu_custom_call.1} parent=75 // pred_fallthru
          _
        // Predicated region
        $region93: #{tpu_custom_call.1} parent=75 // pred_check
          %p542 = pneg %p230
        $region94: #{tpu_custom_call.1} parent=75 // pred_check_branch
          %544 = sbr.rel (%p542) target = $region96
        $region95: #{tpu_custom_call.1} parent=75 // pred_region
          %545 = dma.done [#allocation9], 1024
        $region96: #{tpu_custom_call.1} parent=75 // pred_fallthru
          _
        // Predicated region
        $region97: #{tpu_custom_call.1} parent=75 // pred_check
          %p546 = pneg %p272
        $region98: #{tpu_custom_call.1} parent=75 // pred_check_branch
          %548 = sbr.rel (%p546) target = $region100
        $region99: #{tpu_custom_call.1} parent=75 // pred_region
          %549 = dma.done [#allocation12], 1024
        $region100: #{tpu_custom_call.1} parent=75 // pred_fallthru
          _
        // Predicated region
        $region101: #{tpu_custom_call.1} parent=75 // pred_check
          %p550 = pneg %p314
        $region102: #{tpu_custom_call.1} parent=75 // pred_check_branch
          %552 = sbr.rel (%p550) target = $region104
        $region103: #{tpu_custom_call.1} parent=75 // pred_region
          %553 = dma.done [#allocation12], 2048
        $region104: #{tpu_custom_call.1} parent=75 // pred_fallthru
          _
        %s554 = sand.u32 %s44, 1
        %s555 = scalar_lea.sflag [#allocation3], %s554
        %s556 = sand.u32 %s44, 1
        %s557 = smul.addr %s556, 16
        %s558 = scalar_lea.vmem [#allocation2], %s557
        %p559 = pneg %p57
        %p560 = pneg %p54
        %s561 = sand.u32 %s36, 1
        %s562 = scalar_lea.sflag [#allocation6], %s561
        %s563 = sand.u32 %s70, 1
        %s564 = smul.addr %s563, 8
        %s565 = scalar_lea.vmem [#allocation5], %s564
        %p566 = pneg %p83
        %p567 = pneg %p80
        %p568 = pneg %p104
        %p569 = pneg %p101
        %p570 = pneg %p125
        %p571 = pneg %p122
        %p572 = pneg %p146
        %p573 = pneg %p143
        %p574 = pneg %p167
        %p575 = pneg %p164
        %p576 = pneg %p188
        %p577 = pneg %p185
        %p578 = pneg %p209
        %p579 = pneg %p206
        %p580 = pneg %p230
        %p581 = pneg %p227
        %p582 = pneg %p251
        %p583 = pneg %p248
        %p584 = pneg %p272
        %p585 = pneg %p269
        %p586 = pneg %p293
        %p587 = pneg %p290
        %p588 = pneg %p314
        %p589 = pneg %p311
        %p590 = pneg %p335
        %p591 = pneg %p332
        %p592 = pneg %p361
        %p593 = pneg %p358
        %s594 = sand.u32 %s348, 1
        %s595 = scalar_lea.sflag [#allocation4], %s594
        %s596 = sand.u32 %s348, 1
        %s597 = smul.addr %s596, 16
        %s598 = scalar_lea.vmem [#allocation14], %s597
        %s599 = smul.u32 2, %s36
        %s600 = smul.u32 2, %s36
        %s601 = smul.u32 2, %s36
        %v603 = vld [vmem:[%s520] sm:$0xff]
        %v604 = vld [vmem:[%s520 + $0x8] sm:$0xff]
        %v605 = vld [vmem:[#allocation7] sm:$0xf]
        %v606 = vld [vmem:[#allocation7 + $0x4] sm:$0xf]
        %v607 = vld [vmem:[#allocation7 + $0x8] sm:$0xf]
        %v608 = vld [vmem:[#allocation7 + $0xc] sm:$0xf]
        %v609 = vld [vmem:[#allocation7 + $0x10] sm:$0xf]
        %v610 = vld [vmem:[#allocation7 + $0x14] sm:$0xf]
        %v611 = vld [vmem:[#allocation7 + $0x18] sm:$0xf]
        %v612 = vld [vmem:[#allocation7 + $0x1c] sm:$0xf]
        %v613 = vld [vmem:[#allocation7 + $0x20] sm:$0xf]
        %v614 = vld [vmem:[#allocation7 + $0x24] sm:$0xf]
        %v615 = vld [vmem:[#allocation7 + $0x28] sm:$0xf]
        %v616 = vld [vmem:[#allocation7 + $0x2c] sm:$0xf]
        %v617 = vld [vmem:[#allocation7 + $0x30] sm:$0xf]
        %v618 = vld [vmem:[#allocation7 + $0x34] sm:$0xf]
        %v619 = vld [vmem:[#allocation7 + $0x38] sm:$0xf]
        %v620 = vld [vmem:[#allocation7 + $0x3c] sm:$0xf]
        %v621 = vld [vmem:[#allocation7 + $0x40] sm:$0xf]
        %v622 = vld [vmem:[#allocation7 + $0x44] sm:$0xf]
        %v623 = vld [vmem:[#allocation7 + $0x48] sm:$0xf]
        %v624 = vld [vmem:[#allocation7 + $0x4c] sm:$0xf]
        %v625 = vld [vmem:[#allocation7 + $0x50] sm:$0xf]
        %v626 = vld [vmem:[#allocation7 + $0x54] sm:$0xf]
        %v627 = vld [vmem:[#allocation7 + $0x58] sm:$0xf]
        %v628 = vld [vmem:[#allocation7 + $0x5c] sm:$0xf]
        %v629 = vld [vmem:[#allocation7 + $0x60] sm:$0xf]
        %v630 = vld [vmem:[#allocation7 + $0x64] sm:$0xf]
        %v631 = vld [vmem:[#allocation7 + $0x68] sm:$0xf]
        %v632 = vld [vmem:[#allocation7 + $0x6c] sm:$0xf]
        %v633 = vld [vmem:[#allocation7 + $0x70] sm:$0xf]
        %v634 = vld [vmem:[#allocation7 + $0x74] sm:$0xf]
        %v635 = vld [vmem:[#allocation7 + $0x78] sm:$0xf]
        %v636 = vld [vmem:[#allocation7 + $0x7c] sm:$0xf]
        %v637 = vld [vmem:[%s3] sm:$0x1]
        %v639 = vlaneseq
        %v640 = vshrl.u32 %v639, 7
        %v641 = vsub.s32 0, %v640
        %v642 = vrot.slane %v637, %v641
        %v646 = vunpack.c.l.b16 %v603
        %v647 = vunpack.c.h.b16 %v603
        %v648 = vunpack.c.l.b16 %v604
        %v649 = vunpack.c.h.b16 %v604
        %v650 = vpack.c.b16 %v648, %v646
        %v651 = vpack.c.b16 %v649, %v647
        %v686 = vunpack.c.l.b16 %v605
        %v687 = vunpack.c.l.b16 %v606
        %v688 = vunpack.c.l.b16 %v607
        %v689 = vunpack.c.l.b16 %v608
        %v690 = vunpack.c.l.b16 %v609
        %v691 = vunpack.c.l.b16 %v610
        %v692 = vunpack.c.l.b16 %v611
        %v693 = vunpack.c.l.b16 %v612
        %v694 = vunpack.c.l.b16 %v613
        %v695 = vunpack.c.l.b16 %v614
        %v696 = vunpack.c.l.b16 %v615
        %v697 = vunpack.c.l.b16 %v616
        %v698 = vunpack.c.l.b16 %v617
        %v699 = vunpack.c.l.b16 %v618
        %v700 = vunpack.c.l.b16 %v619
        %v701 = vunpack.c.l.b16 %v620
        %v702 = vunpack.c.l.b16 %v621
        %v703 = vunpack.c.l.b16 %v622
        %v704 = vunpack.c.l.b16 %v623
        %v705 = vunpack.c.l.b16 %v624
        %v706 = vunpack.c.l.b16 %v625
        %v707 = vunpack.c.l.b16 %v626
        %v708 = vunpack.c.l.b16 %v627
        %v709 = vunpack.c.l.b16 %v628
        %v710 = vunpack.c.l.b16 %v629
        %v711 = vunpack.c.l.b16 %v630
        %v712 = vunpack.c.l.b16 %v631
        %v713 = vunpack.c.l.b16 %v632
        %v714 = vunpack.c.l.b16 %v633
        %v715 = vunpack.c.l.b16 %v634
        %v716 = vunpack.c.l.b16 %v635
        %v717 = vunpack.c.l.b16 %v636
        %v718 = vpack.c.b16 %v687, %v686
        %v719 = vpack.c.b16 %v689, %v688
        %v720 = vpack.c.b16 %v691, %v690
        %v721 = vpack.c.b16 %v693, %v692
        %v722 = vpack.c.b16 %v695, %v694
        %v723 = vpack.c.b16 %v697, %v696
        %v724 = vpack.c.b16 %v699, %v698
        %v725 = vpack.c.b16 %v701, %v700
        %v726 = vpack.c.b16 %v703, %v702
        %v727 = vpack.c.b16 %v705, %v704
        %v728 = vpack.c.b16 %v707, %v706
        %v729 = vpack.c.b16 %v709, %v708
        %v730 = vpack.c.b16 %v711, %v710
        %v731 = vpack.c.b16 %v713, %v712
        %v732 = vpack.c.b16 %v715, %v714
        %v733 = vpack.c.b16 %v717, %v716
        %750 = vmatprep.subr.bf16.mxu0 0
        %751 = vmatpush1.bf16.msra.mxu0 %v725
        %752 = vmatprep.subr.bf16.mxu0 0
        %753 = vmatpush1.bf16.msra.mxu0 %v724
        %754 = vmatprep.subr.bf16.mxu0 0
        %755 = vmatpush1.bf16.msra.mxu0 %v723
        %756 = vmatprep.subr.bf16.mxu0 0
        %757 = vmatpush1.bf16.msra.mxu0 %v722
        %758 = vmatprep.subr.bf16.mxu0 0
        %759 = vmatpush1.bf16.msra.mxu0 %v721
        %760 = vmatprep.subr.bf16.mxu0 0
        %761 = vmatpush1.bf16.msra.mxu0 %v720
        %762 = vmatprep.subr.bf16.mxu0 0
        %763 = vmatpush1.bf16.msra.mxu0 %v719
        %764 = vmatprep.subr.bf16.mxu0 0
        %765 = vmatpush1.bf16.msra.mxu0 %v718
        %766 = vmatprep.subr.bf16.mxu0 0
        %767 = vmatpush2.bf16.msra.mxu0 %v733
        %768 = vmatprep.subr.bf16.mxu0 0
        %769 = vmatpush2.bf16.msra.mxu0 %v732
        %770 = vmatprep.subr.bf16.mxu0 0
        %771 = vmatpush2.bf16.msra.mxu0 %v731
        %772 = vmatprep.subr.bf16.mxu0 0
        %773 = vmatpush2.bf16.msra.mxu0 %v730
        %774 = vmatprep.subr.bf16.mxu0 0
        %775 = vmatpush2.bf16.msra.mxu0 %v729
        %776 = vmatprep.subr.bf16.mxu0 0
        %777 = vmatpush2.bf16.msra.mxu0 %v728
        %778 = vmatprep.subr.bf16.mxu0 0
        %779 = vmatpush2.bf16.msra.mxu0 %v727
        %780 = vmatprep.subr.bf16.mxu0 0
        %781 = vmatpush2.bf16.msra.mxu0 %v726
        %782 = vmatprep.mubr.bf16.mxu0 %v651
        %783 = vmatmul.mubr.bf16.gmra.mxu0 %v650
        %v784 = vpop.f32.mrf.mxu0
        %v785 = vadd.f32 %v642, %v784
        %v786 = vpop.f32.mrf.mxu0
        %v787 = vpop.f32.mrf.mxu0
        %v788 = vadd.f32 %v642, %v787
        %v789 = vpop.f32.mrf.mxu0
        %790 = vdwg.mxu0
        %791 = vadd.xlane.f32.xlu0 %v785
        %v792 = vpop.xlane.xlu0 %791
        %793 = vadd.xlane.f32.xlu0 %v788
        %v794 = vpop.xlane.xlu0 %793
        %v795 = vrcp.pop 128.0
        %v796 = vmul.f32 %v792, %v795
        %v797 = vmul.f32 %v794, %v795
        %v798 = vsub.f32 %v785, %v796
        %v799 = vsub.f32 %v788, %v797
        %v800 = vmul.f32 %v798, %v798
        %v801 = vmul.f32 %v799, %v799
        %802 = vadd.xlane.f32.xlu0 %v800
        %v803 = vpop.xlane.xlu0 %802
        %804 = vadd.xlane.f32.xlu0 %v801
        %v805 = vpop.xlane.xlu0 %804
        %v806 = vmul.f32 %v803, %v795
        %v807 = vmul.f32 %v805, %v795
        %v808 = vadd.f32 %v806, 1e-05
        %v809 = vadd.f32 %v807, 1e-05
        %v810 = vrsqrt.pop %v808
        %v811 = vrsqrt.pop %v809
        %v812 = vmul.f32 %v798, %v810
        %v813 = vmul.f32 %v799, %v811
        %v814 = vld [vmem:[%s4] sm:$0x1]
        %v816 = vlaneseq
        %v817 = vshrl.u32 %v816, 7
        %v818 = vsub.s32 0, %v817
        %v819 = vrot.slane %v814, %v818
        %v821 = vmul.f32 %v812, %v819
        %v822 = vmul.f32 %v813, %v819
        %v823 = vld [vmem:[%s5] sm:$0x1]
        %v825 = vlaneseq
        %v826 = vshrl.u32 %v825, 7
        %v827 = vsub.s32 0, %v826
        %v828 = vrot.slane %v823, %v827
        %v830 = vadd.f32 %v821, %v828
        %v831 = vadd.f32 %v822, %v828
        %v832 = vtanh.pop %v830
        %v833 = vtanh.pop %v831
        %v834 = vpack.c.bf16 %v833, %v832
        %v835 = vld [vmem:[%s529] sm:$0xf]
        %v836 = vld [vmem:[%s529 + $0x4] sm:$0xf]
        %v839 = vunpack.c.l.b16 %v835
        %v840 = vunpack.c.l.b16 %v836
        %v841 = vpack.c.b16 %v840, %v839
        %v843 = vld [vmem:[#allocation8] sm:$0xff]
        %v844 = vld [vmem:[#allocation8 + $0x8] sm:$0xff]
        %v845 = vld [vmem:[#allocation8 + $0x10] sm:$0xff]
        %v846 = vld [vmem:[#allocation8 + $0x18] sm:$0xff]
        %v847 = vld [vmem:[#allocation8 + $0x20] sm:$0xff]
        %v848 = vld [vmem:[#allocation8 + $0x28] sm:$0xff]
        %v849 = vld [vmem:[#allocation8 + $0x30] sm:$0xff]
        %v850 = vld [vmem:[#allocation8 + $0x38] sm:$0xff]
        %v851 = vld [vmem:[#allocation8 + $0x40] sm:$0xff]
        %v852 = vld [vmem:[#allocation8 + $0x48] sm:$0xff]
        %v853 = vld [vmem:[#allocation8 + $0x50] sm:$0xff]
        %v854 = vld [vmem:[#allocation8 + $0x58] sm:$0xff]
        %v855 = vld [vmem:[#allocation8 + $0x60] sm:$0xff]
        %v856 = vld [vmem:[#allocation8 + $0x68] sm:$0xff]
        %v857 = vld [vmem:[#allocation8 + $0x70] sm:$0xff]
        %v858 = vld [vmem:[#allocation8 + $0x78] sm:$0xff]
        %v859 = vld [vmem:[#allocation8 + $0x80] sm:$0xff]
        %v860 = vld [vmem:[#allocation8 + $0x88] sm:$0xff]
        %v861 = vld [vmem:[#allocation8 + $0x90] sm:$0xff]
        %v862 = vld [vmem:[#allocation8 + $0x98] sm:$0xff]
        %v863 = vld [vmem:[#allocation8 + $0xa0] sm:$0xff]
        %v864 = vld [vmem:[#allocation8 + $0xa8] sm:$0xff]
        %v865 = vld [vmem:[#allocation8 + $0xb0] sm:$0xff]
        %v866 = vld [vmem:[#allocation8 + $0xb8] sm:$0xff]
        %v867 = vld [vmem:[#allocation8 + $0xc0] sm:$0xff]
        %v868 = vld [vmem:[#allocation8 + $0xc8] sm:$0xff]
        %v869 = vld [vmem:[#allocation8 + $0xd0] sm:$0xff]
        %v870 = vld [vmem:[#allocation8 + $0xd8] sm:$0xff]
        %v871 = vld [vmem:[#allocation8 + $0xe0] sm:$0xff]
        %v872 = vld [vmem:[#allocation8 + $0xe8] sm:$0xff]
        %v873 = vld [vmem:[#allocation8 + $0xf0] sm:$0xff]
        %v874 = vld [vmem:[#allocation8 + $0xf8] sm:$0xff]
        %v875 = vld [vmem:[%s7] sm:$0x3]
        %v877 = vlaneseq
        %v878 = vshrl.u32 %v877, 7
        %v879 = vsub.s32 0, %v878
        %v880 = vrot.slane %v875, %v879
        %v881 = vlaneseq
        %v882 = vshrl.u32 %v881, 7
        %v883 = vsub.s32 1, %v882
        %v884 = vrot.slane %v875, %v883
        %v919 = vunpack.c.l.b16 %v843
        %v920 = vunpack.c.h.b16 %v843
        %v921 = vunpack.c.l.b16 %v844
        %v922 = vunpack.c.h.b16 %v844
        %v923 = vunpack.c.l.b16 %v845
        %v924 = vunpack.c.h.b16 %v845
        %v925 = vunpack.c.l.b16 %v846
        %v926 = vunpack.c.h.b16 %v846
        %v927 = vunpack.c.l.b16 %v847
        %v928 = vunpack.c.h.b16 %v847
        %v929 = vunpack.c.l.b16 %v848
        %v930 = vunpack.c.h.b16 %v848
        %v931 = vunpack.c.l.b16 %v849
        %v932 = vunpack.c.h.b16 %v849
        %v933 = vunpack.c.l.b16 %v850
        %v934 = vunpack.c.h.b16 %v850
        %v935 = vunpack.c.l.b16 %v851
        %v936 = vunpack.c.h.b16 %v851
        %v937 = vunpack.c.l.b16 %v852
        %v938 = vunpack.c.h.b16 %v852
        %v939 = vunpack.c.l.b16 %v853
        %v940 = vunpack.c.h.b16 %v853
        %v941 = vunpack.c.l.b16 %v854
        %v942 = vunpack.c.h.b16 %v854
        %v943 = vunpack.c.l.b16 %v855
        %v944 = vunpack.c.h.b16 %v855
        %v945 = vunpack.c.l.b16 %v856
        %v946 = vunpack.c.h.b16 %v856
        %v947 = vunpack.c.l.b16 %v857
        %v948 = vunpack.c.h.b16 %v857
        %v949 = vunpack.c.l.b16 %v858
        %v950 = vunpack.c.h.b16 %v858
        %v951 = vunpack.c.l.b16 %v859
        %v952 = vunpack.c.h.b16 %v859
        %v953 = vunpack.c.l.b16 %v860
        %v954 = vunpack.c.h.b16 %v860
        %v955 = vunpack.c.l.b16 %v861
        %v956 = vunpack.c.h.b16 %v861
        %v957 = vunpack.c.l.b16 %v862
        %v958 = vunpack.c.h.b16 %v862
        %v959 = vunpack.c.l.b16 %v863
        %v960 = vunpack.c.h.b16 %v863
        %v961 = vunpack.c.l.b16 %v864
        %v962 = vunpack.c.h.b16 %v864
        %v963 = vunpack.c.l.b16 %v865
        %v964 = vunpack.c.h.b16 %v865
        %v965 = vunpack.c.l.b16 %v866
        %v966 = vunpack.c.h.b16 %v866
        %v967 = vunpack.c.l.b16 %v867
        %v968 = vunpack.c.h.b16 %v867
        %v969 = vunpack.c.l.b16 %v868
        %v970 = vunpack.c.h.b16 %v868
        %v971 = vunpack.c.l.b16 %v869
        %v972 = vunpack.c.h.b16 %v869
        %v973 = vunpack.c.l.b16 %v870
        %v974 = vunpack.c.h.b16 %v870
        %v975 = vunpack.c.l.b16 %v871
        %v976 = vunpack.c.h.b16 %v871
        %v977 = vunpack.c.l.b16 %v872
        %v978 = vunpack.c.h.b16 %v872
        %v979 = vunpack.c.l.b16 %v873
        %v980 = vunpack.c.h.b16 %v873
        %v981 = vunpack.c.l.b16 %v874
        %v982 = vunpack.c.h.b16 %v874
        %v983 = vpack.c.b16 %v921, %v919
        %v984 = vpack.c.b16 %v922, %v920
        %v985 = vpack.c.b16 %v925, %v923
        %v986 = vpack.c.b16 %v926, %v924
        %v987 = vpack.c.b16 %v929, %v927
        %v988 = vpack.c.b16 %v930, %v928
        %v989 = vpack.c.b16 %v933, %v931
        %v990 = vpack.c.b16 %v934, %v932
        %v991 = vpack.c.b16 %v937, %v935
        %v992 = vpack.c.b16 %v938, %v936
        %v993 = vpack.c.b16 %v941, %v939
        %v994 = vpack.c.b16 %v942, %v940
        %v995 = vpack.c.b16 %v945, %v943
        %v996 = vpack.c.b16 %v946, %v944
        %v997 = vpack.c.b16 %v949, %v947
        %v998 = vpack.c.b16 %v950, %v948
        %v999 = vpack.c.b16 %v953, %v951
        %v1000 = vpack.c.b16 %v954, %v952
        %v1001 = vpack.c.b16 %v957, %v955
        %v1002 = vpack.c.b16 %v958, %v956
        %v1003 = vpack.c.b16 %v961, %v959
        %v1004 = vpack.c.b16 %v962, %v960
        %v1005 = vpack.c.b16 %v965, %v963
        %v1006 = vpack.c.b16 %v966, %v964
        %v1007 = vpack.c.b16 %v969, %v967
        %v1008 = vpack.c.b16 %v970, %v968
        %v1009 = vpack.c.b16 %v973, %v971
        %v1010 = vpack.c.b16 %v974, %v972
        %v1011 = vpack.c.b16 %v977, %v975
        %v1012 = vpack.c.b16 %v978, %v976
        %v1013 = vpack.c.b16 %v981, %v979
        %v1014 = vpack.c.b16 %v982, %v980
        %1047 = vmatprep.subr.bf16.mxu0 %v998
        %1048 = vmatpush1.bf16.msra.mxu0 %v997
        %1049 = vmatprep.subr.bf16.mxu0 %v996
        %1050 = vmatpush1.bf16.msra.mxu0 %v995
        %1051 = vmatprep.subr.bf16.mxu0 %v994
        %1052 = vmatpush1.bf16.msra.mxu0 %v993
        %1053 = vmatprep.subr.bf16.mxu0 %v992
        %1054 = vmatpush1.bf16.msra.mxu0 %v991
        %1055 = vmatprep.subr.bf16.mxu0 %v990
        %1056 = vmatpush1.bf16.msra.mxu0 %v989
        %1057 = vmatprep.subr.bf16.mxu0 %v988
        %1058 = vmatpush1.bf16.msra.mxu0 %v987
        %1059 = vmatprep.subr.bf16.mxu0 %v986
        %1060 = vmatpush1.bf16.msra.mxu0 %v985
        %1061 = vmatprep.subr.bf16.mxu0 %v984
        %1062 = vmatpush1.bf16.msra.mxu0 %v983
        %1063 = vmatprep.subr.bf16.mxu0 %v1014
        %1064 = vmatpush2.bf16.msra.mxu0 %v1013
        %1065 = vmatprep.subr.bf16.mxu0 %v1012
        %1066 = vmatpush2.bf16.msra.mxu0 %v1011
        %1067 = vmatprep.subr.bf16.mxu0 %v1010
        %1068 = vmatpush2.bf16.msra.mxu0 %v1009
        %1069 = vmatprep.subr.bf16.mxu0 %v1008
        %1070 = vmatpush2.bf16.msra.mxu0 %v1007
        %1071 = vmatprep.subr.bf16.mxu0 %v1006
        %1072 = vmatpush2.bf16.msra.mxu0 %v1005
        %1073 = vmatprep.subr.bf16.mxu0 %v1004
        %1074 = vmatpush2.bf16.msra.mxu0 %v1003
        %1075 = vmatprep.subr.bf16.mxu0 %v1002
        %1076 = vmatpush2.bf16.msra.mxu0 %v1001
        %1077 = vmatprep.subr.bf16.mxu0 %v1000
        %1078 = vmatpush2.bf16.msra.mxu0 %v999
        %1079 = vmatprep.mubr.bf16.mxu0 %v841
        %1080 = vmatmul.mubr.bf16.gmra.mxu0 %v834
        %v1081 = vpop.f32.mrf.mxu0
        %v1082 = vadd.f32 %v880, %v1081
        %v1083 = vpop.f32.mrf.mxu0
        %v1084 = vadd.f32 %v884, %v1083
        %v1085 = vpop.f32.mrf.mxu0
        %v1086 = vadd.f32 %v880, %v1085
        %v1087 = vpop.f32.mrf.mxu0
        %v1088 = vadd.f32 %v884, %v1087
        %1089 = vdwg.mxu0
        %v1090 = vmax.f32 %v1082, 0.0
        %v1091 = vmax.f32 %v1084, 0.0
        %v1092 = vmax.f32 %v1086, 0.0
        %v1093 = vmax.f32 %v1088, 0.0
        %v1094 = vpack.c.bf16 %v1092, %v1090
        %v1095 = vpack.c.bf16 %v1093, %v1091
        %v1096 = vld [vmem:[#allocation10] sm:$0xf]
        %v1097 = vld [vmem:[#allocation10 + $0x4] sm:$0xf]
        %v1098 = vld [vmem:[#allocation10 + $0x8] sm:$0xf]
        %v1099 = vld [vmem:[#allocation10 + $0xc] sm:$0xf]
        %v1100 = vld [vmem:[#allocation10 + $0x10] sm:$0xf]
        %v1101 = vld [vmem:[#allocation10 + $0x14] sm:$0xf]
        %v1102 = vld [vmem:[#allocation10 + $0x18] sm:$0xf]
        %v1103 = vld [vmem:[#allocation10 + $0x1c] sm:$0xf]
        %v1104 = vld [vmem:[#allocation10 + $0x20] sm:$0xf]
        %v1105 = vld [vmem:[#allocation10 + $0x24] sm:$0xf]
        %v1106 = vld [vmem:[#allocation10 + $0x28] sm:$0xf]
        %v1107 = vld [vmem:[#allocation10 + $0x2c] sm:$0xf]
        %v1108 = vld [vmem:[#allocation10 + $0x30] sm:$0xf]
        %v1109 = vld [vmem:[#allocation10 + $0x34] sm:$0xf]
        %v1110 = vld [vmem:[#allocation10 + $0x38] sm:$0xf]
        %v1111 = vld [vmem:[#allocation10 + $0x3c] sm:$0xf]
        %v1112 = vld [vmem:[%s9] sm:$0x1]
        %v1114 = vlaneseq
        %v1115 = vshrl.u32 %v1114, 7
        %v1116 = vsub.s32 0, %v1115
        %v1117 = vrot.slane %v1112, %v1116
        %v1135 = vunpack.c.l.b16 %v1096
        %v1136 = vunpack.c.l.b16 %v1097
        %v1137 = vunpack.c.l.b16 %v1098
        %v1138 = vunpack.c.l.b16 %v1099
        %v1139 = vunpack.c.l.b16 %v1100
        %v1140 = vunpack.c.l.b16 %v1101
        %v1141 = vunpack.c.l.b16 %v1102
        %v1142 = vunpack.c.l.b16 %v1103
        %v1143 = vunpack.c.l.b16 %v1104
        %v1144 = vunpack.c.l.b16 %v1105
        %v1145 = vunpack.c.l.b16 %v1106
        %v1146 = vunpack.c.l.b16 %v1107
        %v1147 = vunpack.c.l.b16 %v1108
        %v1148 = vunpack.c.l.b16 %v1109
        %v1149 = vunpack.c.l.b16 %v1110
        %v1150 = vunpack.c.l.b16 %v1111
        %v1151 = vpack.c.b16 %v1136, %v1135
        %v1152 = vpack.c.b16 %v1138, %v1137
        %v1153 = vpack.c.b16 %v1140, %v1139
        %v1154 = vpack.c.b16 %v1142, %v1141
        %v1155 = vpack.c.b16 %v1144, %v1143
        %v1156 = vpack.c.b16 %v1146, %v1145
        %v1157 = vpack.c.b16 %v1148, %v1147
        %v1158 = vpack.c.b16 %v1150, %v1149
        %1167 = vmatprep.subr.bf16.mxu0 0
        %1168 = vmatpush1.bf16.msra.mxu0 %v1158
        %1169 = vmatprep.subr.bf16.mxu0 0
        %1170 = vmatpush1.bf16.msra.mxu0 %v1157
        %1171 = vmatprep.subr.bf16.mxu0 0
        %1172 = vmatpush1.bf16.msra.mxu0 %v1156
        %1173 = vmatprep.subr.bf16.mxu0 0
        %1174 = vmatpush1.bf16.msra.mxu0 %v1155
        %1175 = vmatprep.subr.bf16.mxu0 0
        %1176 = vmatpush1.bf16.msra.mxu0 %v1154
        %1177 = vmatprep.subr.bf16.mxu0 0
        %1178 = vmatpush1.bf16.msra.mxu0 %v1153
        %1179 = vmatprep.subr.bf16.mxu0 0
        %1180 = vmatpush1.bf16.msra.mxu0 %v1152
        %1181 = vmatprep.subr.bf16.mxu0 0
        %1182 = vmatpush1.bf16.msra.mxu0 %v1151
        %1183 = vmatprep.subr.bf16.mxu0 0
        %1184 = vmatpush2.bf16.msra.mxu0 0
        %1185 = vmatprep.subr.bf16.mxu0 0
        %1186 = vmatpush2.bf16.msra.mxu0 0
        %1187 = vmatprep.subr.bf16.mxu0 0
        %1188 = vmatpush2.bf16.msra.mxu0 0
        %1189 = vmatprep.subr.bf16.mxu0 0
        %1190 = vmatpush2.bf16.msra.mxu0 0
        %1191 = vmatprep.subr.bf16.mxu0 0
        %1192 = vmatpush2.bf16.msra.mxu0 0
        %1193 = vmatprep.subr.bf16.mxu0 0
        %1194 = vmatpush2.bf16.msra.mxu0 0
        %1195 = vmatprep.subr.bf16.mxu0 0
        %1196 = vmatpush2.bf16.msra.mxu0 0
        %1197 = vmatprep.subr.bf16.mxu0 0
        %1198 = vmatpush2.bf16.msra.mxu0 0
        %1199 = vmatprep.mubr.bf16.mxu0 0
        %1200 = vmatmul.mubr.bf16.gmra.mxu0 %v1094
        %v1201 = vpop.f32.mrf.mxu0
        %v1202 = vadd.f32 %v1117, %v1201
        %v1203 = vpop.f32.mrf.mxu0
        %v1204 = vpop.f32.mrf.mxu0
        %v1205 = vadd.f32 %v1117, %v1204
        %v1206 = vpop.f32.mrf.mxu0
        %1207 = vdwg.mxu0
        %v1208 = vld [vmem:[#allocation11] sm:$0xf]
        %v1209 = vld [vmem:[#allocation11 + $0x4] sm:$0xf]
        %v1210 = vld [vmem:[#allocation11 + $0x8] sm:$0xf]
        %v1211 = vld [vmem:[#allocation11 + $0xc] sm:$0xf]
        %v1212 = vld [vmem:[#allocation11 + $0x10] sm:$0xf]
        %v1213 = vld [vmem:[#allocation11 + $0x14] sm:$0xf]
        %v1214 = vld [vmem:[#allocation11 + $0x18] sm:$0xf]
        %v1215 = vld [vmem:[#allocation11 + $0x1c] sm:$0xf]
        %v1216 = vld [vmem:[#allocation11 + $0x20] sm:$0xf]
        %v1217 = vld [vmem:[#allocation11 + $0x24] sm:$0xf]
        %v1218 = vld [vmem:[#allocation11 + $0x28] sm:$0xf]
        %v1219 = vld [vmem:[#allocation11 + $0x2c] sm:$0xf]
        %v1220 = vld [vmem:[#allocation11 + $0x30] sm:$0xf]
        %v1221 = vld [vmem:[#allocation11 + $0x34] sm:$0xf]
        %v1222 = vld [vmem:[#allocation11 + $0x38] sm:$0xf]
        %v1223 = vld [vmem:[#allocation11 + $0x3c] sm:$0xf]
        %v1224 = vld [vmem:[%s11] sm:$0x1]
        %v1226 = vlaneseq
        %v1227 = vshrl.u32 %v1226, 7
        %v1228 = vsub.s32 0, %v1227
        %v1229 = vrot.slane %v1224, %v1228
        %v1247 = vunpack.c.l.b16 %v1208
        %v1248 = vunpack.c.l.b16 %v1209
        %v1249 = vunpack.c.l.b16 %v1210
        %v1250 = vunpack.c.l.b16 %v1211
        %v1251 = vunpack.c.l.b16 %v1212
        %v1252 = vunpack.c.l.b16 %v1213
        %v1253 = vunpack.c.l.b16 %v1214
        %v1254 = vunpack.c.l.b16 %v1215
        %v1255 = vunpack.c.l.b16 %v1216
        %v1256 = vunpack.c.l.b16 %v1217
        %v1257 = vunpack.c.l.b16 %v1218
        %v1258 = vunpack.c.l.b16 %v1219
        %v1259 = vunpack.c.l.b16 %v1220
        %v1260 = vunpack.c.l.b16 %v1221
        %v1261 = vunpack.c.l.b16 %v1222
        %v1262 = vunpack.c.l.b16 %v1223
        %v1263 = vpack.c.b16 %v1248, %v1247
        %v1264 = vpack.c.b16 %v1250, %v1249
        %v1265 = vpack.c.b16 %v1252, %v1251
        %v1266 = vpack.c.b16 %v1254, %v1253
        %v1267 = vpack.c.b16 %v1256, %v1255
        %v1268 = vpack.c.b16 %v1258, %v1257
        %v1269 = vpack.c.b16 %v1260, %v1259
        %v1270 = vpack.c.b16 %v1262, %v1261
        %1279 = vmatprep.subr.bf16.mxu0 0
        %1280 = vmatpush1.bf16.msra.mxu0 %v1270
        %1281 = vmatprep.subr.bf16.mxu0 0
        %1282 = vmatpush1.bf16.msra.mxu0 %v1269
        %1283 = vmatprep.subr.bf16.mxu0 0
        %1284 = vmatpush1.bf16.msra.mxu0 %v1268
        %1285 = vmatprep.subr.bf16.mxu0 0
        %1286 = vmatpush1.bf16.msra.mxu0 %v1267
        %1287 = vmatprep.subr.bf16.mxu0 0
        %1288 = vmatpush1.bf16.msra.mxu0 %v1266
        %1289 = vmatprep.subr.bf16.mxu0 0
        %1290 = vmatpush1.bf16.msra.mxu0 %v1265
        %1291 = vmatprep.subr.bf16.mxu0 0
        %1292 = vmatpush1.bf16.msra.mxu0 %v1264
        %1293 = vmatprep.subr.bf16.mxu0 0
        %1294 = vmatpush1.bf16.msra.mxu0 %v1263
        %1295 = vmatprep.subr.bf16.mxu0 0
        %1296 = vmatpush2.bf16.msra.mxu0 0
        %1297 = vmatprep.subr.bf16.mxu0 0
        %1298 = vmatpush2.bf16.msra.mxu0 0
        %1299 = vmatprep.subr.bf16.mxu0 0
        %1300 = vmatpush2.bf16.msra.mxu0 0
        %1301 = vmatprep.subr.bf16.mxu0 0
        %1302 = vmatpush2.bf16.msra.mxu0 0
        %1303 = vmatprep.subr.bf16.mxu0 0
        %1304 = vmatpush2.bf16.msra.mxu0 0
        %1305 = vmatprep.subr.bf16.mxu0 0
        %1306 = vmatpush2.bf16.msra.mxu0 0
        %1307 = vmatprep.subr.bf16.mxu0 0
        %1308 = vmatpush2.bf16.msra.mxu0 0
        %1309 = vmatprep.subr.bf16.mxu0 0
        %1310 = vmatpush2.bf16.msra.mxu0 0
        %1311 = vmatprep.mubr.bf16.mxu0 0
        %1312 = vmatmul.mubr.bf16.gmra.mxu0 %v1095
        %v1313 = vpop.f32.mrf.mxu0
        %v1314 = vadd.f32 %v1229, %v1313
        %v1315 = vpop.f32.mrf.mxu0
        %v1316 = vpop.f32.mrf.mxu0
        %v1317 = vadd.f32 %v1229, %v1316
        %v1318 = vpop.f32.mrf.mxu0
        %1319 = vdwg.mxu0
        %v1320 = vmax.f32 %v1202, 0.0
        %v1321 = vmax.f32 %v1205, 0.0
        %v1322 = vpack.c.bf16 %v1321, %v1320
        %v1323 = vmax.f32 %v1314, 0.0
        %v1324 = vmax.f32 %v1317, 0.0
        %v1325 = vpack.c.bf16 %v1324, %v1323
        %v1326 = vld [vmem:[#allocation13] sm:$0xf]
        %v1327 = vld [vmem:[#allocation13 + $0x4] sm:$0xf]
        %v1328 = vld [vmem:[#allocation13 + $0x8] sm:$0xf]
        %v1329 = vld [vmem:[#allocation13 + $0xc] sm:$0xf]
        %v1330 = vld [vmem:[#allocation13 + $0x10] sm:$0xf]
        %v1331 = vld [vmem:[#allocation13 + $0x14] sm:$0xf]
        %v1332 = vld [vmem:[#allocation13 + $0x18] sm:$0xf]
        %v1333 = vld [vmem:[#allocation13 + $0x1c] sm:$0xf]
        %v1334 = vld [vmem:[#allocation13 + $0x20] sm:$0xf]
        %v1335 = vld [vmem:[#allocation13 + $0x24] sm:$0xf]
        %v1336 = vld [vmem:[#allocation13 + $0x28] sm:$0xf]
        %v1337 = vld [vmem:[#allocation13 + $0x2c] sm:$0xf]
        %v1338 = vld [vmem:[#allocation13 + $0x30] sm:$0xf]
        %v1339 = vld [vmem:[#allocation13 + $0x34] sm:$0xf]
        %v1340 = vld [vmem:[#allocation13 + $0x38] sm:$0xf]
        %v1341 = vld [vmem:[#allocation13 + $0x3c] sm:$0xf]
        %v1342 = vld [vmem:[#allocation13 + $0x40] sm:$0xf]
        %v1343 = vld [vmem:[#allocation13 + $0x44] sm:$0xf]
        %v1344 = vld [vmem:[#allocation13 + $0x48] sm:$0xf]
        %v1345 = vld [vmem:[#allocation13 + $0x4c] sm:$0xf]
        %v1346 = vld [vmem:[#allocation13 + $0x50] sm:$0xf]
        %v1347 = vld [vmem:[#allocation13 + $0x54] sm:$0xf]
        %v1348 = vld [vmem:[#allocation13 + $0x58] sm:$0xf]
        %v1349 = vld [vmem:[#allocation13 + $0x5c] sm:$0xf]
        %v1350 = vld [vmem:[#allocation13 + $0x60] sm:$0xf]
        %v1351 = vld [vmem:[#allocation13 + $0x64] sm:$0xf]
        %v1352 = vld [vmem:[#allocation13 + $0x68] sm:$0xf]
        %v1353 = vld [vmem:[#allocation13 + $0x6c] sm:$0xf]
        %v1354 = vld [vmem:[#allocation13 + $0x70] sm:$0xf]
        %v1355 = vld [vmem:[#allocation13 + $0x74] sm:$0xf]
        %v1356 = vld [vmem:[#allocation13 + $0x78] sm:$0xf]
        %v1357 = vld [vmem:[#allocation13 + $0x7c] sm:$0xf]
        %v1358 = vld [vmem:[%s13] sm:$0x1]
        %v1360 = vlaneseq
        %v1361 = vshrl.u32 %v1360, 7
        %v1362 = vsub.s32 0, %v1361
        %v1363 = vrot.slane %v1358, %v1362
        %v1397 = vunpack.c.l.b16 %v1326
        %v1398 = vunpack.c.l.b16 %v1327
        %v1399 = vunpack.c.l.b16 %v1328
        %v1400 = vunpack.c.l.b16 %v1329
        %v1401 = vunpack.c.l.b16 %v1330
        %v1402 = vunpack.c.l.b16 %v1331
        %v1403 = vunpack.c.l.b16 %v1332
        %v1404 = vunpack.c.l.b16 %v1333
        %v1405 = vunpack.c.l.b16 %v1334
        %v1406 = vunpack.c.l.b16 %v1335
        %v1407 = vunpack.c.l.b16 %v1336
        %v1408 = vunpack.c.l.b16 %v1337
        %v1409 = vunpack.c.l.b16 %v1338
        %v1410 = vunpack.c.l.b16 %v1339
        %v1411 = vunpack.c.l.b16 %v1340
        %v1412 = vunpack.c.l.b16 %v1341
        %v1413 = vunpack.c.l.b16 %v1342
        %v1414 = vunpack.c.l.b16 %v1343
        %v1415 = vunpack.c.l.b16 %v1344
        %v1416 = vunpack.c.l.b16 %v1345
        %v1417 = vunpack.c.l.b16 %v1346
        %v1418 = vunpack.c.l.b16 %v1347
        %v1419 = vunpack.c.l.b16 %v1348
        %v1420 = vunpack.c.l.b16 %v1349
        %v1421 = vunpack.c.l.b16 %v1350
        %v1422 = vunpack.c.l.b16 %v1351
        %v1423 = vunpack.c.l.b16 %v1352
        %v1424 = vunpack.c.l.b16 %v1353
        %v1425 = vunpack.c.l.b16 %v1354
        %v1426 = vunpack.c.l.b16 %v1355
        %v1427 = vunpack.c.l.b16 %v1356
        %v1428 = vunpack.c.l.b16 %v1357
        %v1429 = vpack.c.b16 %v1398, %v1397
        %v1430 = vpack.c.b16 %v1400, %v1399
        %v1431 = vpack.c.b16 %v1402, %v1401
        %v1432 = vpack.c.b16 %v1404, %v1403
        %v1433 = vpack.c.b16 %v1406, %v1405
        %v1434 = vpack.c.b16 %v1408, %v1407
        %v1435 = vpack.c.b16 %v1410, %v1409
        %v1436 = vpack.c.b16 %v1412, %v1411
        %v1437 = vpack.c.b16 %v1414, %v1413
        %v1438 = vpack.c.b16 %v1416, %v1415
        %v1439 = vpack.c.b16 %v1418, %v1417
        %v1440 = vpack.c.b16 %v1420, %v1419
        %v1441 = vpack.c.b16 %v1422, %v1421
        %v1442 = vpack.c.b16 %v1424, %v1423
        %v1443 = vpack.c.b16 %v1426, %v1425
        %v1444 = vpack.c.b16 %v1428, %v1427
        %1461 = vmatprep.subr.bf16.mxu0 0
        %1462 = vmatpush1.bf16.msra.mxu0 %v1436
        %1463 = vmatprep.subr.bf16.mxu0 0
        %1464 = vmatpush1.bf16.msra.mxu0 %v1435
        %1465 = vmatprep.subr.bf16.mxu0 0
        %1466 = vmatpush1.bf16.msra.mxu0 %v1434
        %1467 = vmatprep.subr.bf16.mxu0 0
        %1468 = vmatpush1.bf16.msra.mxu0 %v1433
        %1469 = vmatprep.subr.bf16.mxu0 0
        %1470 = vmatpush1.bf16.msra.mxu0 %v1432
        %1471 = vmatprep.subr.bf16.mxu0 0
        %1472 = vmatpush1.bf16.msra.mxu0 %v1431
        %1473 = vmatprep.subr.bf16.mxu0 0
        %1474 = vmatpush1.bf16.msra.mxu0 %v1430
        %1475 = vmatprep.subr.bf16.mxu0 0
        %1476 = vmatpush1.bf16.msra.mxu0 %v1429
        %1477 = vmatprep.subr.bf16.mxu0 0
        %1478 = vmatpush2.bf16.msra.mxu0 %v1444
        %1479 = vmatprep.subr.bf16.mxu0 0
        %1480 = vmatpush2.bf16.msra.mxu0 %v1443
        %1481 = vmatprep.subr.bf16.mxu0 0
        %1482 = vmatpush2.bf16.msra.mxu0 %v1442
        %1483 = vmatprep.subr.bf16.mxu0 0
        %1484 = vmatpush2.bf16.msra.mxu0 %v1441
        %1485 = vmatprep.subr.bf16.mxu0 0
        %1486 = vmatpush2.bf16.msra.mxu0 %v1440
        %1487 = vmatprep.subr.bf16.mxu0 0
        %1488 = vmatpush2.bf16.msra.mxu0 %v1439
        %1489 = vmatprep.subr.bf16.mxu0 0
        %1490 = vmatpush2.bf16.msra.mxu0 %v1438
        %1491 = vmatprep.subr.bf16.mxu0 0
        %1492 = vmatpush2.bf16.msra.mxu0 %v1437
        %1493 = vmatprep.mubr.bf16.mxu0 %v1325
        %1494 = vmatmul.mubr.bf16.gmra.mxu0 %v1322
        %v1495 = vpop.f32.mrf.mxu0
        %v1496 = vadd.f32 %v1363, %v1495
        %v1497 = vpop.f32.mrf.mxu0
        %v1498 = vpop.f32.mrf.mxu0
        %v1499 = vadd.f32 %v1363, %v1498
        %v1500 = vpop.f32.mrf.mxu0
        %1501 = vdwg.mxu0
        %1502 = vst [vmem:[%s598] sm:$0xff] %v1496
        %1503 = vst [vmem:[%s598 + $0x8] sm:$0xff] %v1499
        %s1504 = sand.u32 %s348, 1
        %s1505 = scalar_lea.sflag [#allocation4], %s1504
        %s1506 = sand.u32 %s348, 1
        %s1507 = smul.addr %s1506, 16
        %s1508 = scalar_lea.vmem [#allocation14], %s1507
        // Predicated region
        $region105: #{tpu_custom_call.1} parent=75 // pred_check
          %p1509 = pneg %p358
        $region106: #{tpu_custom_call.1} parent=75 // pred_check_branch
          %1511 = sbr.rel (%p1509) target = $region108
        $region107: #{tpu_custom_call.1} parent=75 // pred_region
          %s1512 = smul.u32 2, %s36
          %s1514 = ssub.s32 256, 256
          %1515 = vsyncadd %s1505, %s1514
          %s1516 = smul.addr %s1512, 128
          %s1517 = scalar_lea.hbm %s14, %s1516
          %s1518 = sshll.u32 %s1508, 4
          %s1519 = int_to_ptr.vmem [resolvable:$true] %s1518
          %1524 = dma.vmem_to_hbm [thread:$0]  %s1519, 256, %s1517, %s1505, 128, 128, 8
        $region108: #{tpu_custom_call.1} parent=75 // pred_fallthru
          _
      $region76: #{tpu_custom_call.1} parent=5 // pred_fallthru
        _
      %p1525 = scmp.le.s32.totalorder 2, %s31
      // Predicated region
      $region109: #{tpu_custom_call.1} parent=5 // pred_check
        %p1526 = pneg %p1525
      $region110: #{tpu_custom_call.1} parent=5 // pred_check_branch
        %1528 = sbr.rel (%p1526) target = $region112
      $region111: #{tpu_custom_call.1} parent=5 // pred_region
        %s1529 = ssub.s32 %s31, 2
        // Predicated region
        $region113: #{tpu_custom_call.1} parent=111 // pred_check
          %p1530 = pneg %p364
        $region114: #{tpu_custom_call.1} parent=111 // pred_check_branch
          %1532 = sbr.rel (%p1530) target = $region116
        $region115: #{tpu_custom_call.1} parent=111 // pred_region
          %s1533 = sand.u32 %s349, 1
          %s1534 = scalar_lea.sflag [#allocation4], %s1533
          %s1535 = sand.u32 %s349, 1
          %s1536 = smul.addr %s1535, 16
          %s1537 = scalar_lea.vmem [#allocation14], %s1536
          %1538 = dma.done %s1534, 256
        $region116: #{tpu_custom_call.1} parent=111 // pred_fallthru
          _
      $region112: #{tpu_custom_call.1} parent=5 // pred_fallthru
        _
    $region6: #{tpu_custom_call.1} parent=1 // loop_footer
      %s35 = sadd.s32 1, %s31
    $region7: #{tpu_custom_call.1} parent=1 // loop_footer_branch
      %30 = sbr.rel target = $region3
    $region8: #{tpu_custom_call.1} parent=1 // loop_exit
      _
    %1539 = vsyncpa [#allocation3], 1
    %s1540 = scalar_lea.sflag [#allocation3], 1
    %1541 = vsyncpa %s1540, 1
    %1542 = vsyncpa [#allocation6], 1
    %s1543 = scalar_lea.sflag [#allocation6], 1
    %1544 = vsyncpa %s1543, 1
    %1545 = vsyncpa [#allocation9], 1
    %1546 = vsyncpa [#allocation12], 1
    %1547 = vsyncpa [#allocation4], 1
    %s1548 = scalar_lea.sflag [#allocation4], 1
    %1549 = vsyncpa %s1548, 1

</llo_original>
